<compile_context>
chip_gen: v6e
topology: v6e:2x2x1
jax: 0.10.0
libtpu: 0.0.40
codegen_flags: <defaults>
</compile_context>

<pallas_src>
import math

import jax
import jax.numpy as jnp
import numpy as np
from jax.experimental import pallas as pl
from jax.experimental.pallas import tpu as pltpu

HALF_LOG_2PI = 0.5 * math.log(2.0 * math.pi)
LATENT_PAD = 128  # latent lanes padded to one full vreg lane width


def _round_up(x: int, m: int) -> int:
    return ((x + m - 1) // m) * m


def make_vi_kernel(obs_scale: float):
    """Fused VAE forward + variational-inference statistics kernel."""

    def kernel(x_ref, eps_z_ref, eps_x_ref,                     # data + host noise
               wenc_ref, benc_ref, wdec_ref, bdec_ref,          # resident weights
               xhat_ref, z_ref, stats_ref):                     # outputs
        bb, d = x_ref.shape
        lp = z_ref.shape[1]

        x = x_ref[...]                                          # [bb, d] f32

        # ---- fused encoder: one lane-dense MXU pass producing (mu | logvar) ----
        enc = jnp.dot(x.astype(jnp.bfloat16), wenc_ref[...],
                      preferred_element_type=jnp.float32) + benc_ref[...]   # [bb, 2*lp]
        mu = enc[:, :lp]                                        # [bb, lp]
        logvar = enc[:, lp:]                                    # [bb, lp]
        sigma = jnp.exp(0.5 * logvar)

        # ---- z = qz.rsample()  (reparameterization with streamed-in noise) ----
        eps_z = eps_z_ref[...]                                  # [bb, lp]
        z = mu + sigma * eps_z
        z_ref[...] = z

        # ---- xhat = px.rsample()  (decoder mean + obs-scale noise) ----
        xhat_mu = jnp.dot(z.astype(jnp.bfloat16), wdec_ref[...],
                          preferred_element_type=jnp.float32) + bdec_ref[...]  # [bb, d]
        xhat = xhat_mu + jnp.float32(obs_scale) * eps_x_ref[...]
        xhat_ref[...] = xhat

        # ---- per-sample statistics ----
        diff = xhat - x
        log_px = -jnp.sum(diff * diff, axis=1, keepdims=True)   # [bb, 1]

        # kl = log_qz - log_pz with (z-mu)/sigma == eps_z and log(sigma) == 0.5*logvar;
        # the 0.5*log(2*pi) constants cancel between the two log-probs.  Padded
        # latent lanes (mu=logvar=0, z=eps) contribute exactly zero.
        kl = jnp.sum(0.5 * (z * z - eps_z * eps_z) - 0.5 * logvar,
                     axis=1, keepdims=True)                     # [bb, 1]

        # Lane-dense packed stats: lane 0 = log_px, lane 1 = kl, rest zero.
        lane = jax.lax.broadcasted_iota(jnp.int32, (bb, lp), 1)
        stats_ref[...] = jnp.where(lane == 0, log_px,
                                   jnp.where(lane == 1, kl, jnp.float32(0.0)))

    return kernel


def variational_inference(x_nchw, params, key, *, beta=1.0, obs_scale=1.0):
    """Returns (loss, xhat, diagnostics, outputs) mirroring the PyTorch module."""
    B, C, H, W = x_nchw.shape
    D = C * H * W
    L = params["w_mu"].shape[1]
    if D % 128 != 0:
        raise ValueError("feature dim must be a multiple of 128")
    if L > LATENT_PAD:
        raise ValueError("latent dim must be <= 128")

    # ---- pack encoder weights into one lane-dense [D, 256] matrix (mu | logvar) ----
    w_enc = jnp.zeros((D, 2 * LATENT_PAD), jnp.float32)
    w_enc = w_enc.at[:, :L].set(params["w_mu"].astype(jnp.float32))
    w_enc = w_enc.at[:, LATENT_PAD:LATENT_PAD + L].set(params["w_lv"].astype(jnp.float32))
    b_enc = jnp.zeros((1, 2 * LATENT_PAD), jnp.float32)
    b_enc = b_enc.at[:, :L].set(params["b_mu"].reshape(1, L).astype(jnp.float32))
    b_enc = b_enc.at[:, LATENT_PAD:LATENT_PAD + L].set(params["b_lv"].reshape(1, L).astype(jnp.float32))
    w_dec = jnp.zeros((LATENT_PAD, D), jnp.float32).at[:L, :].set(
        params["w_dec"].astype(jnp.float32))
    b_dec = params["b_dec"].reshape(1, D).astype(jnp.float32)

    # bf16 MXU operands; biases stay f32 (VPU adds in f32 on all generations).
    w_enc = w_enc.astype(jnp.bfloat16)
    w_dec = w_dec.astype(jnp.bfloat16)

    # ---- batch padding / grid over batch blocks ----
    block_b = min(256, _round_up(B, 8))
    B_pad = _round_up(B, block_b)
    n_blocks = B_pad // block_b
    x_flat = x_nchw.reshape(B, D).astype(jnp.float32)
    x_pad = jnp.pad(x_flat, ((0, B_pad - B), (0, 0)))

    # Host-generated reparameterization noise (CPU/interpret-safe; see header note).
    kz, kx = jax.random.split(key)
    eps_z = jax.random.normal(kz, (B_pad, LATENT_PAD), dtype=jnp.float32)
    eps_x = jax.random.normal(kx, (B_pad, D), dtype=jnp.float32)

    grid_spec = pltpu.PrefetchScalarGridSpec(
        num_scalar_prefetch=0,
        grid=(n_blocks,),
        in_specs=[
            pl.BlockSpec((block_b, D), lambda i: (i, 0)),              # x
            pl.BlockSpec((block_b, LATENT_PAD), lambda i: (i, 0)),     # eps_z
            pl.BlockSpec((block_b, D), lambda i: (i, 0)),              # eps_x
            pl.BlockSpec((D, 2 * LATENT_PAD), lambda i: (0, 0)),       # w_enc (resident)
            pl.BlockSpec((1, 2 * LATENT_PAD), lambda i: (0, 0)),       # b_enc
            pl.BlockSpec((LATENT_PAD, D), lambda i: (0, 0)),           # w_dec (resident)
            pl.BlockSpec((1, D), lambda i: (0, 0)),                    # b_dec
        ],
        out_specs=[
            pl.BlockSpec((block_b, D), lambda i: (i, 0)),              # xhat
            pl.BlockSpec((block_b, LATENT_PAD), lambda i: (i, 0)),     # z
            pl.BlockSpec((block_b, LATENT_PAD), lambda i: (i, 0)),     # packed stats
        ],
    )

    out_shapes = (
        jax.ShapeDtypeStruct((B_pad, D), jnp.float32),           # xhat (flat)
        jax.ShapeDtypeStruct((B_pad, LATENT_PAD), jnp.float32),  # z (padded lanes)
        jax.ShapeDtypeStruct((B_pad, LATENT_PAD), jnp.float32),  # stats (lane-dense)
    )

    xhat_flat, z_pad, stats = pl.pallas_call(
        make_vi_kernel(obs_scale),
        out_shape=out_shapes,
        grid_spec=grid_spec,
        compiler_params=pltpu.CompilerParams(dimension_semantics=("parallel",)),
    )(x_pad, eps_z, eps_x, w_enc, b_enc, w_dec, b_dec)

    # Finish the tiny scalar tail in the wrapper (lane-dense kernel outputs).
    log_px = stats[:B, 0]
    kl = stats[:B, 1]
    elbo = log_px - kl
    loss = -jnp.mean(log_px - jnp.float32(beta) * kl)
    xhat = xhat_flat[:B].reshape(B, C, H, W)
    z = z_pad[:B, :L]
    diagnostics = {"elbo": elbo, "log_px": log_px, "kl": kl}
    outputs = {"xhat": xhat, "z": z}
    return loss, xhat, diagnostics, outputs


def reference_from_samples(x_nchw, params, z, xhat, *, beta=1.0):
    """Textbook (PyTorch-module) formulas evaluated at the kernel's own samples
    z = qz.rsample() and xhat = px.rsample().  Uses the unsimplified Gaussian
    log-prob expressions, so it independently checks the in-kernel algebra."""
    B, C, H, W = x_nchw.shape
    D = C * H * W
    x = x_nchw.reshape(B, D).astype(jnp.float32)
    xb = x.astype(jnp.bfloat16)
    mu = jnp.dot(xb, params["w_mu"].astype(jnp.bfloat16),
                 preferred_element_type=jnp.float32) + params["b_mu"].reshape(1, -1)
    logvar = jnp.dot(xb, params["w_lv"].astype(jnp.bfloat16),
                     preferred_element_type=jnp.float32) + params["b_lv"].reshape(1, -1)
    sigma = jnp.exp(0.5 * logvar)

    xh = xhat.reshape(B, D)
    log_px = -jnp.sum((xh - x) ** 2, axis=1)
    log_pz = jnp.sum(-0.5 * z * z - HALF_LOG_2PI, axis=1)
    zn = (z - mu) / sigma
    log_qz = jnp.sum(-0.5 * zn * zn - jnp.log(sigma) - HALF_LOG_2PI, axis=1)
    kl = log_qz - log_pz
    elbo = log_px - kl
    loss = -jnp.mean(log_px - beta * kl)
    return loss, {"elbo": elbo, "log_px": log_px, "kl": kl}, mu, sigma


if __name__ == "__main__":
    B, C, H, W = 2, 4, 16, 16
    D = C * H * W
    L = 32           # latent dim
    BETA = 1.0
    OBS_SCALE = 1.0  # scale of px = Normal(decoder(z), OBS_SCALE)

    key = jax.random.PRNGKey(0)
    kx, kwm, kwl, kwd, kbd, knoise = jax.random.split(key, 6)

    x = jax.random.normal(kx, (B, C, H, W), dtype=jnp.float32)
    params = {
        "w_mu": 0.02 * jax.random.normal(kwm, (D, L), dtype=jnp.float32),
        "b_mu": jnp.zeros((L,), dtype=jnp.float32),
        "w_lv": 0.02 * jax.random.normal(kwl, (D, L), dtype=jnp.float32),
        "b_lv": jnp.zeros((L,), dtype=jnp.float32),
        "w_dec": 0.02 * jax.random.normal(kwd, (L, D), dtype=jnp.float32),
        "b_dec": 0.01 * jax.random.normal(kbd, (D,), dtype=jnp.float32),
    }

    loss, xhat, diag, outputs = variational_inference(
        x, params, knoise, beta=BETA, obs_scale=OBS_SCALE)
    jax.block_until_ready((loss, xhat, diag, outputs))

    # ---- correctness checks against the textbook formulation ----
    ref_loss, ref_diag, mu_ref, sigma_ref = reference_from_samples(
        x, params, outputs["z"], xhat, beta=BETA)

    np.testing.assert_allclose(np.asarray(loss), np.asarray(ref_loss),
                               rtol=5e-3, atol=5e-2)
    np.testing.assert_allclose(np.asarray(diag["log_px"]), np.asarray(ref_diag["log_px"]),
                               rtol=5e-3, atol=5e-2)
    np.testing.assert_allclose(np.asarray(diag["kl"]), np.asarray(ref_diag["kl"]),
                               rtol=5e-3, atol=5e-2)
    np.testing.assert_allclose(np.asarray(diag["elbo"]), np.asarray(ref_diag["elbo"]),
                               rtol=5e-3, atol=5e-2)

    # px.rsample() noise sanity: residual of xhat around the decoder mean ~ N(0, OBS_SCALE).
    xhat_mu_ref = (jnp.dot(outputs["z"].astype(jnp.bfloat16),
                           params["w_dec"].astype(jnp.bfloat16),
                           preferred_element_type=jnp.float32)
                   + params["b_dec"].reshape(1, -1))
    resid = (np.asarray(xhat).reshape(B, -1) - np.asarray(xhat_mu_ref)) / OBS_SCALE
    assert abs(resid.mean()) < 0.25 and 0.7 < resid.std() < 1.3, (resid.mean(), resid.std())

    # qz.rsample() noise sanity (loose: only B*L = 64 samples).
    eps_hat = (np.asarray(outputs["z"]) - np.asarray(mu_ref)) / np.asarray(sigma_ref)
    assert abs(eps_hat.mean()) < 0.6 and 0.5 < eps_hat.std() < 1.6, (eps_hat.mean(), eps_hat.std())

    assert np.isfinite(np.asarray(loss))
    print("KERNEL_OK")
</pallas_src>

<mosaic_0001>
module attributes {stable_mosaic.version = 11 : i64} {
  func.func @kernel(%arg0: i32, %arg1: memref<8x1024xf32, #tpu.memory_space<vmem>>, %arg2: memref<8x128xf32, #tpu.memory_space<vmem>>, %arg3: memref<8x1024xf32, #tpu.memory_space<vmem>>, %arg4: memref<1024x256xbf16, #tpu.memory_space<vmem>>, %arg5: memref<1x256xf32, #tpu.memory_space<vmem>>, %arg6: memref<128x1024xbf16, #tpu.memory_space<vmem>>, %arg7: memref<1x1024xf32, #tpu.memory_space<vmem>>, %arg8: memref<8x1024xf32, #tpu.memory_space<vmem>>, %arg9: memref<8x128xf32, #tpu.memory_space<vmem>>, %arg10: memref<8x128xf32, #tpu.memory_space<vmem>>) attributes {dimension_semantics = [#tpu.dimension_semantics<parallel>], iteration_bounds = array<i64: 1>, scalar_prefetch = 0 : i64, scratch_operands = 0 : i64, tpu.core_type = #tpu.core_type<tc>, window_params = [{transform_indices = @transform_0, window_bounds = array<i64: 8, 1024>}, {transform_indices = @transform_1, window_bounds = array<i64: 8, 128>}, {transform_indices = @transform_2, window_bounds = array<i64: 8, 1024>}, {pipeline_mode = #tpu.pipeline_mode<synchronous>, transform_indices = @transform_3, window_bounds = array<i64: 1024, 256>}, {pipeline_mode = #tpu.pipeline_mode<synchronous>, transform_indices = @transform_4, window_bounds = array<i64: 1, 256>}, {pipeline_mode = #tpu.pipeline_mode<synchronous>, transform_indices = @transform_5, window_bounds = array<i64: 128, 1024>}, {pipeline_mode = #tpu.pipeline_mode<synchronous>, transform_indices = @transform_6, window_bounds = array<i64: 1, 1024>}, {transform_indices = @transform_7, window_bounds = array<i64: 8, 1024>}, {transform_indices = @transform_8, window_bounds = array<i64: 8, 128>}, {transform_indices = @transform_9, window_bounds = array<i64: 8, 128>}]} {
    %c0 = arith.constant 0 : index
    %c0_0 = arith.constant 0 : index
    %0 = vector.load %arg1[%c0, %c0_0] : memref<8x1024xf32, #tpu.memory_space<vmem>>, vector<8x1024xf32>
    %1 = arith.truncf %0 : vector<8x1024xf32> to vector<8x1024xbf16>
    %c0_1 = arith.constant 0 : index
    %c0_2 = arith.constant 0 : index
    %2 = vector.load %arg4[%c0_1, %c0_2] : memref<1024x256xbf16, #tpu.memory_space<vmem>>, vector<1024x256xbf16>
    %cst = arith.constant dense<0.000000e+00> : vector<8x256xf32>
    %3 = tpu.matmul %1, %2, %cst {dimension_numbers = #tpu.dot_dimension_numbers<[1], [0], [0], [1], [0, 0, 1, 1], [], []>} : vector<8x1024xbf16>, vector<1024x256xbf16>, vector<8x256xf32> -> vector<8x256xf32>
    %c0_3 = arith.constant 0 : index
    %c0_4 = arith.constant 0 : index
    %4 = vector.load %arg5[%c0_3, %c0_4] : memref<1x256xf32, #tpu.memory_space<vmem>>, vector<1x256xf32>
    %5 = vector.broadcast %4 : vector<1x256xf32> to vector<8x256xf32>
    %6 = arith.addf %3, %5 : vector<8x256xf32>
    %7 = vector.extract_strided_slice %6 {offsets = [0, 0], sizes = [8, 128], strides = [1, 1]} : vector<8x256xf32> to vector<8x128xf32>
    %8 = vector.extract_strided_slice %6 {offsets = [0, 128], sizes = [8, 128], strides = [1, 1]} : vector<8x256xf32> to vector<8x128xf32>
    %cst_5 = arith.constant 5.000000e-01 : f32
    %9 = vector.broadcast %cst_5 : f32 to vector<8x128xf32>
    %10 = arith.mulf %9, %8 : vector<8x128xf32>
    %11 = math.exp %10 : vector<8x128xf32>
    %c0_6 = arith.constant 0 : index
    %c0_7 = arith.constant 0 : index
    %12 = vector.load %arg2[%c0_6, %c0_7] : memref<8x128xf32, #tpu.memory_space<vmem>>, vector<8x128xf32>
    %13 = arith.mulf %11, %12 : vector<8x128xf32>
    %14 = arith.addf %7, %13 : vector<8x128xf32>
    %c0_8 = arith.constant 0 : index
    %c0_9 = arith.constant 0 : index
    %15 = vector.load %arg9[%c0_8, %c0_9] : memref<8x128xf32, #tpu.memory_space<vmem>>, vector<8x128xf32>
    tpu.vector_store %arg9[%c0_8, %c0_9], %14 {strides = array<i32>} : memref<8x128xf32, #tpu.memory_space<vmem>>, vector<8x128xf32>,
    %16 = arith.truncf %14 : vector<8x128xf32> to vector<8x128xbf16>
    %c0_10 = arith.constant 0 : index
    %c0_11 = arith.constant 0 : index
    %17 = vector.load %arg6[%c0_10, %c0_11] : memref<128x1024xbf16, #tpu.memory_space<vmem>>, vector<128x1024xbf16>
    %cst_12 = arith.constant dense<0.000000e+00> : vector<8x1024xf32>
    %18 = tpu.matmul %16, %17, %cst_12 {dimension_numbers = #tpu.dot_dimension_numbers<[1], [0], [0], [1], [0, 0, 1, 1], [], []>} : vector<8x128xbf16>, vector<128x1024xbf16>, vector<8x1024xf32> -> vector<8x1024xf32>
    %c0_13 = arith.constant 0 : index
    %c0_14 = arith.constant 0 : index
    %19 = vector.load %arg7[%c0_13, %c0_14] : memref<1x1024xf32, #tpu.memory_space<vmem>>, vector<1x1024xf32>
    %20 = vector.broadcast %19 : vector<1x1024xf32> to vector<8x1024xf32>
    %21 = arith.addf %18, %20 : vector<8x1024xf32>
    %c0_15 = arith.constant 0 : index
    %c0_16 = arith.constant 0 : index
    %22 = vector.load %arg3[%c0_15, %c0_16] : memref<8x1024xf32, #tpu.memory_space<vmem>>, vector<8x1024xf32>
    %cst_17 = arith.constant 1.000000e+00 : f32
    %23 = vector.broadcast %cst_17 : f32 to vector<8x1024xf32>
    %24 = arith.mulf %23, %22 : vector<8x1024xf32>
    %25 = arith.addf %21, %24 : vector<8x1024xf32>
    %c0_18 = arith.constant 0 : index
    %c0_19 = arith.constant 0 : index
    %26 = vector.load %arg8[%c0_18, %c0_19] : memref<8x1024xf32, #tpu.memory_space<vmem>>, vector<8x1024xf32>
    tpu.vector_store %arg8[%c0_18, %c0_19], %25 {strides = array<i32>} : memref<8x1024xf32, #tpu.memory_space<vmem>>, vector<8x1024xf32>,
    %27 = arith.subf %25, %0 : vector<8x1024xf32>
    %28 = arith.mulf %27, %27 : vector<8x1024xf32>
    %cst_20 = arith.constant dense<0.000000e+00> : vector<8xf32>
    %29 = vector.multi_reduction <add>, %28, %cst_20 [1] : vector<8x1024xf32> to vector<8xf32>
    %30 = vector.shape_cast %29 : vector<8xf32> to vector<8x1xf32>
    %cst_21 = arith.constant 0.000000e+00 : f32
    %31 = vector.broadcast %cst_21 : f32 to vector<8x1xf32>
    %32 = arith.subf %31, %30 : vector<8x1xf32>
    %33 = arith.mulf %14, %14 : vector<8x128xf32>
    %34 = arith.mulf %12, %12 : vector<8x128xf32>
    %35 = arith.subf %33, %34 : vector<8x128xf32>
    %cst_22 = arith.constant 5.000000e-01 : f32
    %36 = vector.broadcast %cst_22 : f32 to vector<8x128xf32>
    %37 = arith.mulf %36, %35 : vector<8x128xf32>
    %cst_23 = arith.constant 5.000000e-01 : f32
    %38 = vector.broadcast %cst_23 : f32 to vector<8x128xf32>
    %39 = arith.mulf %38, %8 : vector<8x128xf32>
    %40 = arith.subf %37, %39 : vector<8x128xf32>
    %cst_24 = arith.constant dense<0.000000e+00> : vector<8xf32>
    %41 = vector.multi_reduction <add>, %40, %cst_24 [1] : vector<8x128xf32> to vector<8xf32>
    %42 = vector.shape_cast %41 : vector<8xf32> to vector<8x1xf32>
    %43 = tpu.iota {dimensions = array<i32: 1>} : vector<8x128xi32>
    %c0_i32 = arith.constant 0 : i32
    %44 = vector.broadcast %c0_i32 : i32 to vector<8x128xi32>
    %45 = arith.cmpi eq, %43, %44 : vector<8x128xi32>
    %c1_i32 = arith.constant 1 : i32
    %46 = vector.broadcast %c1_i32 : i32 to vector<8x128xi32>
    %47 = arith.cmpi eq, %43, %46 : vector<8x128xi32>
    %cst_25 = arith.constant 0.000000e+00 : f32
    %48 = vector.shape_cast %42 : vector<8x1xf32> to vector<8x1xf32>
    %49 = vector.broadcast %48 : vector<8x1xf32> to vector<8x128xf32>
    %50 = vector.broadcast %cst_25 : f32 to vector<8x128xf32>
    %51 = arith.select %47, %49, %50 : vector<8x128xi1>, vector<8x128xf32>
    %52 = vector.shape_cast %32 : vector<8x1xf32> to vector<8x1xf32>
    %53 = vector.broadcast %52 : vector<8x1xf32> to vector<8x128xf32>
    %54 = arith.select %45, %53, %51 : vector<8x128xi1>, vector<8x128xf32>
    %c0_26 = arith.constant 0 : index
    %c0_27 = arith.constant 0 : index
    %55 = vector.load %arg10[%c0_26, %c0_27] : memref<8x128xf32, #tpu.memory_space<vmem>>, vector<8x128xf32>
    tpu.vector_store %arg10[%c0_26, %c0_27], %54 {strides = array<i32>} : memref<8x128xf32, #tpu.memory_space<vmem>>, vector<8x128xf32>,
    return
  }
  func.func @transform_0(%arg0: i32) -> (i32, i32) {
    %c0_i32 = arith.constant 0 : i32
    %c0_i32_0 = arith.constant 0 : i32
    return %arg0, %c0_i32 : i32, i32
  }
  func.func @transform_1(%arg0: i32) -> (i32, i32) {
    %c0_i32 = arith.constant 0 : i32
    %c0_i32_0 = arith.constant 0 : i32
    return %arg0, %c0_i32 : i32, i32
  }
  func.func @transform_2(%arg0: i32) -> (i32, i32) {
    %c0_i32 = arith.constant 0 : i32
    %c0_i32_0 = arith.constant 0 : i32
    return %arg0, %c0_i32 : i32, i32
  }
  func.func @transform_3(%arg0: i32) -> (i32, i32) {
    %c0_i32 = arith.constant 0 : i32
    %c0_i32_0 = arith.constant 0 : i32
    %c0_i32_1 = arith.constant 0 : i32
    return %c0_i32, %c0_i32_0 : i32, i32
  }
  func.func @transform_4(%arg0: i32) -> (i32, i32) {
    %c0_i32 = arith.constant 0 : i32
    %c0_i32_0 = arith.constant 0 : i32
    %c0_i32_1 = arith.constant 0 : i32
    return %c0_i32, %c0_i32_0 : i32, i32
  }
  func.func @transform_5(%arg0: i32) -> (i32, i32) {
    %c0_i32 = arith.constant 0 : i32
    %c0_i32_0 = arith.constant 0 : i32
    %c0_i32_1 = arith.constant 0 : i32
    return %c0_i32, %c0_i32_0 : i32, i32
  }
  func.func @transform_6(%arg0: i32) -> (i32, i32) {
    %c0_i32 = arith.constant 0 : i32
    %c0_i32_0 = arith.constant 0 : i32
    %c0_i32_1 = arith.constant 0 : i32
    return %c0_i32, %c0_i32_0 : i32, i32
  }
  func.func @transform_7(%arg0: i32) -> (i32, i32) {
    %c0_i32 = arith.constant 0 : i32
    %c0_i32_0 = arith.constant 0 : i32
    return %arg0, %c0_i32 : i32, i32
  }
  func.func @transform_8(%arg0: i32) -> (i32, i32) {
    %c0_i32 = arith.constant 0 : i32
    %c0_i32_0 = arith.constant 0 : i32
    return %arg0, %c0_i32 : i32, i32
  }
  func.func @transform_9(%arg0: i32) -> (i32, i32) {
    %c0_i32 = arith.constant 0 : i32
    %c0_i32_0 = arith.constant 0 : i32
    return %arg0, %c0_i32 : i32, i32
  }
}

</mosaic_0001>

<llo_original>
// kernel: tpu_custom_call.1
$region0: #{tpu_custom_call.1}
  #allocation0 [shape = 'u32[]', space=smem, size = 0x4, offset = 0x4, fixed_abs, tag = 'smem constant byte address 0x4 - core index']
  #allocation1 [shape = 'u32[144,128]{1,0:T(1,128)}', space=vmem, size = 0x12000, scoped, tag = 'internal scratch']
  %s0 = inlined_call_operand.hbm [shape: f32[8,1024], index: 0, kind: input, shape index: {}]
  %s1 = inlined_call_operand.hbm [shape: f32[8,128], index: 1, kind: input, shape index: {}]
  %s2 = inlined_call_operand.hbm [shape: f32[8,1024], index: 2, kind: input, shape index: {}]
  %s3 = inlined_call_operand.hbm [shape: bf16[1024,256], index: 3, kind: input, shape index: {}]
  %s4 = inlined_call_operand.vmem [shape: f32[1,256], index: 4, kind: input, shape index: {}]
  %s5 = inlined_call_operand.hbm [shape: bf16[128,1024], index: 5, kind: input, shape index: {}]
  %s6 = inlined_call_operand.vmem [shape: f32[1,1024], index: 6, kind: input, shape index: {}]
  %s7 = inlined_call_operand.hbm [shape: f32[8,1024], index: 7, kind: output, shape index: {0}]
  %s8 = inlined_call_operand.hbm [shape: f32[8,128], index: 8, kind: output, shape index: {1}]
  %s9 = inlined_call_operand.hbm [shape: f32[8,128], index: 9, kind: output, shape index: {2}]
  %10 = xla_tuple %s7, %s8, %s9
  %s11 = sld [smem:[#allocation0]]
  $region74: #{tpu_custom_call.1} parent=0
    _
  %s13 = ssub.s32 1, %s11
  %s14 = scalar_select 0, %s13, %s11
  $region1: #{tpu_custom_call.1} parent=0
    #allocation2 [shape = 'u8[32768]{0}', space=vmem, size = 0x8000, scoped, tag = 'input window, operand 0, single buffered']
    #allocation3 [shape = 's32[1]{0}', space=sflag, size = 0x4, scoped, tag = 'scoped memory for tpu_custom_call.1']
    #allocation4 [shape = 's32[1]{0}', space=sflag, size = 0x4, scoped, tag = 'scoped memory for tpu_custom_call.1']
    #allocation5 [shape = 'u8[4096]{0}', space=vmem, size = 0x1000, scoped, tag = 'input window, operand 1, single buffered']
    #allocation6 [shape = 's32[1]{0}', space=sflag, size = 0x4, scoped, tag = 'scoped memory for tpu_custom_call.1']
    #allocation7 [shape = 'u8[32768]{0}', space=vmem, size = 0x8000, scoped, tag = 'input window, operand 2, single buffered']
    #allocation8 [shape = 'u8[524288]{0}', space=vmem, size = 0x80000, scoped, tag = 'input window, operand 3, single buffered']
    #allocation9 [shape = 's32[1]{0}', space=sflag, size = 0x4, scoped, tag = 'scoped memory for tpu_custom_call.1']
    #allocation10 [shape = 'u8[262144]{0}', space=vmem, size = 0x40000, scoped, tag = 'input window, operand 5, single buffered']
    #allocation11 [shape = 'u8[32768]{0}', space=vmem, size = 0x8000, scoped, tag = 'output window, operand 0, single buffered']
    #allocation12 [shape = 'u8[4096]{0}', space=vmem, size = 0x1000, scoped, tag = 'output window, operand 1, single buffered']
    #allocation13 [shape = 's32[1]{0}', space=sflag, size = 0x4, scoped, tag = 'scoped memory for tpu_custom_call.1']
    #allocation14 [shape = 'u8[4096]{0}', space=vmem, size = 0x1000, scoped, tag = 'output window, operand 2, single buffered']
    %15 = vsyncpa [#allocation3], 0
    %16 = vsyncpa [#allocation6], 0
    %17 = vsyncpa [#allocation9], 0
    %18 = vsyncpa [#allocation4], 0
    %19 = vsyncpa [#allocation13], 0
    // Predicated region
    $region2: #{tpu_custom_call.1} parent=1 // pred_check
      _
    $region3: #{tpu_custom_call.1} parent=1 // pred_check_branch
      %21 = sbr.rel (0) target = $region5
    $region4: #{tpu_custom_call.1} parent=1 // pred_region
      %s23 = ssub.s32 1024, 1024
      %24 = vsyncadd [#allocation3], %s23
      %s26 = sshll.u32 [#allocation2], 4
      %s27 = int_to_ptr.vmem [resolvable:$true] %s26
      %29 = dma.hbm_to_vmem [thread:$0]  %s0, 1024, %s27, [#allocation3]
    $region5: #{tpu_custom_call.1} parent=1 // pred_fallthru
      _
    // Predicated region
    $region6: #{tpu_custom_call.1} parent=1 // pred_check
      _
    $region7: #{tpu_custom_call.1} parent=1 // pred_check_branch
      %31 = sbr.rel (0) target = $region9
    $region8: #{tpu_custom_call.1} parent=1 // pred_region
      %s33 = ssub.s32 128, 128
      %34 = vsyncadd [#allocation6], %s33
      %s36 = sshll.u32 [#allocation5], 4
      %s37 = int_to_ptr.vmem [resolvable:$true] %s36
      %39 = dma.hbm_to_vmem [thread:$0]  %s1, 128, %s37, [#allocation6]
    $region9: #{tpu_custom_call.1} parent=1 // pred_fallthru
      _
    // Predicated region
    $region10: #{tpu_custom_call.1} parent=1 // pred_check
      _
    $region11: #{tpu_custom_call.1} parent=1 // pred_check_branch
      %41 = sbr.rel (0) target = $region13
    $region12: #{tpu_custom_call.1} parent=1 // pred_region
      %s43 = ssub.s32 1024, 1024
      %44 = vsyncadd [#allocation6], %s43
      %s46 = sshll.u32 [#allocation7], 4
      %s47 = int_to_ptr.vmem [resolvable:$true] %s46
      %49 = dma.hbm_to_vmem [thread:$0]  %s2, 1024, %s47, [#allocation6]
    $region13: #{tpu_custom_call.1} parent=1 // pred_fallthru
      _
    // Predicated region
    $region14: #{tpu_custom_call.1} parent=1 // pred_check
      _
    $region15: #{tpu_custom_call.1} parent=1 // pred_check_branch
      %51 = sbr.rel (0) target = $region17
    $region16: #{tpu_custom_call.1} parent=1 // pred_region
      %s53 = ssub.s32 16384, 16384
      %54 = vsyncadd [#allocation9], %s53
      %s55 = sshll.u32 [#allocation8], 4
      %s56 = int_to_ptr.vmem [resolvable:$true] %s55
      %61 = dma.hbm_to_vmem [thread:$0]  %s3, 16384, %s56, [#allocation9], 128, 128, 8
    $region17: #{tpu_custom_call.1} parent=1 // pred_fallthru
      _
    // Predicated region
    $region18: #{tpu_custom_call.1} parent=1 // pred_check
      _
    $region19: #{tpu_custom_call.1} parent=1 // pred_check_branch
      %63 = sbr.rel (0) target = $region21
    $region20: #{tpu_custom_call.1} parent=1 // pred_region
      _
    $region21: #{tpu_custom_call.1} parent=1 // pred_fallthru
      _
    // Predicated region
    $region22: #{tpu_custom_call.1} parent=1 // pred_check
      _
    $region23: #{tpu_custom_call.1} parent=1 // pred_check_branch
      %65 = sbr.rel (0) target = $region25
    $region24: #{tpu_custom_call.1} parent=1 // pred_region
      %s67 = ssub.s32 8192, 8192
      %68 = vsyncadd [#allocation9], %s67
      %s69 = sshll.u32 [#allocation10], 4
      %s70 = int_to_ptr.vmem [resolvable:$true] %s69
      %75 = dma.hbm_to_vmem [thread:$0]  %s5, 8192, %s70, [#allocation9], 512, 512, 32
    $region25: #{tpu_custom_call.1} parent=1 // pred_fallthru
      _
    // Predicated region
    $region26: #{tpu_custom_call.1} parent=1 // pred_check
      _
    $region27: #{tpu_custom_call.1} parent=1 // pred_check_branch
      %77 = sbr.rel (0) target = $region29
    $region28: #{tpu_custom_call.1} parent=1 // pred_region
      _
    $region29: #{tpu_custom_call.1} parent=1 // pred_fallthru
      _
    // Predicated region
    $region30: #{tpu_custom_call.1} parent=1 // pred_check
      _
    $region31: #{tpu_custom_call.1} parent=1 // pred_check_branch
      %79 = sbr.rel (0) target = $region33
    $region32: #{tpu_custom_call.1} parent=1 // pred_region
      %80 = dma.done [#allocation3], 1024
    $region33: #{tpu_custom_call.1} parent=1 // pred_fallthru
      _
    // Predicated region
    $region34: #{tpu_custom_call.1} parent=1 // pred_check
      _
    $region35: #{tpu_custom_call.1} parent=1 // pred_check_branch
      %82 = sbr.rel (0) target = $region37
    $region36: #{tpu_custom_call.1} parent=1 // pred_region
      %83 = dma.done [#allocation6], 128
    $region37: #{tpu_custom_call.1} parent=1 // pred_fallthru
      _
    // Predicated region
    $region38: #{tpu_custom_call.1} parent=1 // pred_check
      _
    $region39: #{tpu_custom_call.1} parent=1 // pred_check_branch
      %85 = sbr.rel (0) target = $region41
    $region40: #{tpu_custom_call.1} parent=1 // pred_region
      %86 = dma.done [#allocation6], 1024
    $region41: #{tpu_custom_call.1} parent=1 // pred_fallthru
      _
    // Predicated region
    $region42: #{tpu_custom_call.1} parent=1 // pred_check
      _
    $region43: #{tpu_custom_call.1} parent=1 // pred_check_branch
      %88 = sbr.rel (0) target = $region45
    $region44: #{tpu_custom_call.1} parent=1 // pred_region
      %89 = dma.done [#allocation9], 16384
    $region45: #{tpu_custom_call.1} parent=1 // pred_fallthru
      _
    // Predicated region
    $region46: #{tpu_custom_call.1} parent=1 // pred_check
      _
    $region47: #{tpu_custom_call.1} parent=1 // pred_check_branch
      %91 = sbr.rel (0) target = $region49
    $region48: #{tpu_custom_call.1} parent=1 // pred_region
      %92 = dma.done [#allocation9], 8192
    $region49: #{tpu_custom_call.1} parent=1 // pred_fallthru
      _
    %v94 = vld [vmem:[#allocation2] sm:$0xff]
    %v95 = vld [vmem:[#allocation2 + $0x8] sm:$0xff]
    %v96 = vld [vmem:[#allocation2 + $0x10] sm:$0xff]
    %v97 = vld [vmem:[#allocation2 + $0x18] sm:$0xff]
    %v98 = vld [vmem:[#allocation2 + $0x20] sm:$0xff]
    %v99 = vld [vmem:[#allocation2 + $0x28] sm:$0xff]
    %v100 = vld [vmem:[#allocation2 + $0x30] sm:$0xff]
    %v101 = vld [vmem:[#allocation2 + $0x38] sm:$0xff]
    %v102 = vpack.c.bf16 %v94, %v94
    %v103 = vpack.c.bf16 %v95, %v95
    %v104 = vpack.c.bf16 %v96, %v96
    %v105 = vpack.c.bf16 %v97, %v97
    %v106 = vpack.c.bf16 %v98, %v98
    %v107 = vpack.c.bf16 %v99, %v99
    %v108 = vpack.c.bf16 %v100, %v100
    %v109 = vpack.c.bf16 %v101, %v101
    %v110 = vld [vmem:[#allocation8] sm:$0xff]
    %v111 = vld [vmem:[#allocation8 + $0x8] sm:$0xff]
    %v112 = vld [vmem:[#allocation8 + $0x10] sm:$0xff]
    %v113 = vld [vmem:[#allocation8 + $0x18] sm:$0xff]
    %v114 = vld [vmem:[#allocation8 + $0x20] sm:$0xff]
    %v115 = vld [vmem:[#allocation8 + $0x28] sm:$0xff]
    %v116 = vld [vmem:[#allocation8 + $0x30] sm:$0xff]
    %v117 = vld [vmem:[#allocation8 + $0x38] sm:$0xff]
    %v118 = vld [vmem:[#allocation8 + $0x40] sm:$0xff]
    %v119 = vld [vmem:[#allocation8 + $0x48] sm:$0xff]
    %v120 = vld [vmem:[#allocation8 + $0x50] sm:$0xff]
    %v121 = vld [vmem:[#allocation8 + $0x58] sm:$0xff]
    %v122 = vld [vmem:[#allocation8 + $0x60] sm:$0xff]
    %v123 = vld [vmem:[#allocation8 + $0x68] sm:$0xff]
    %v124 = vld [vmem:[#allocation8 + $0x70] sm:$0xff]
    %v125 = vld [vmem:[#allocation8 + $0x78] sm:$0xff]
    %v126 = vld [vmem:[#allocation8 + $0x80] sm:$0xff]
    %v127 = vld [vmem:[#allocation8 + $0x88] sm:$0xff]
    %v128 = vld [vmem:[#allocation8 + $0x90] sm:$0xff]
    %v129 = vld [vmem:[#allocation8 + $0x98] sm:$0xff]
    %v130 = vld [vmem:[#allocation8 + $0xa0] sm:$0xff]
    %v131 = vld [vmem:[#allocation8 + $0xa8] sm:$0xff]
    %v132 = vld [vmem:[#allocation8 + $0xb0] sm:$0xff]
    %v133 = vld [vmem:[#allocation8 + $0xb8] sm:$0xff]
    %v134 = vld [vmem:[#allocation8 + $0xc0] sm:$0xff]
    %v135 = vld [vmem:[#allocation8 + $0xc8] sm:$0xff]
    %v136 = vld [vmem:[#allocation8 + $0xd0] sm:$0xff]
    %v137 = vld [vmem:[#allocation8 + $0xd8] sm:$0xff]
    %v138 = vld [vmem:[#allocation8 + $0xe0] sm:$0xff]
    %v139 = vld [vmem:[#allocation8 + $0xe8] sm:$0xff]
    %v140 = vld [vmem:[#allocation8 + $0xf0] sm:$0xff]
    %v141 = vld [vmem:[#allocation8 + $0xf8] sm:$0xff]
    %v142 = vld [vmem:[#allocation8 + $0x100] sm:$0xff]
    %v143 = vld [vmem:[#allocation8 + $0x108] sm:$0xff]
    %v144 = vld [vmem:[#allocation8 + $0x110] sm:$0xff]
    %v145 = vld [vmem:[#allocation8 + $0x118] sm:$0xff]
    %v146 = vld [vmem:[#allocation8 + $0x120] sm:$0xff]
    %v147 = vld [vmem:[#allocation8 + $0x128] sm:$0xff]
    %v148 = vld [vmem:[#allocation8 + $0x130] sm:$0xff]
    %v149 = vld [vmem:[#allocation8 + $0x138] sm:$0xff]
    %v150 = vld [vmem:[#allocation8 + $0x140] sm:$0xff]
    %v151 = vld [vmem:[#allocation8 + $0x148] sm:$0xff]
    %v152 = vld [vmem:[#allocation8 + $0x150] sm:$0xff]
    %v153 = vld [vmem:[#allocation8 + $0x158] sm:$0xff]
    %v154 = vld [vmem:[#allocation8 + $0x160] sm:$0xff]
    %v155 = vld [vmem:[#allocation8 + $0x168] sm:$0xff]
    %v156 = vld [vmem:[#allocation8 + $0x170] sm:$0xff]
    %v157 = vld [vmem:[#allocation8 + $0x178] sm:$0xff]
    %v158 = vld [vmem:[#allocation8 + $0x180] sm:$0xff]
    %v159 = vld [vmem:[#allocation8 + $0x188] sm:$0xff]
    %v160 = vld [vmem:[#allocation8 + $0x190] sm:$0xff]
    %v161 = vld [vmem:[#allocation8 + $0x198] sm:$0xff]
    %v162 = vld [vmem:[#allocation8 + $0x1a0] sm:$0xff]
    %v163 = vld [vmem:[#allocation8 + $0x1a8] sm:$0xff]
    %v164 = vld [vmem:[#allocation8 + $0x1b0] sm:$0xff]
    %v165 = vld [vmem:[#allocation8 + $0x1b8] sm:$0xff]
    %v166 = vld [vmem:[#allocation8 + $0x1c0] sm:$0xff]
    %v167 = vld [vmem:[#allocation8 + $0x1c8] sm:$0xff]
    %v168 = vld [vmem:[#allocation8 + $0x1d0] sm:$0xff]
    %v169 = vld [vmem:[#allocation8 + $0x1d8] sm:$0xff]
    %v170 = vld [vmem:[#allocation8 + $0x1e0] sm:$0xff]
    %v171 = vld [vmem:[#allocation8 + $0x1e8] sm:$0xff]
    %v172 = vld [vmem:[#allocation8 + $0x1f0] sm:$0xff]
    %v173 = vld [vmem:[#allocation8 + $0x1f8] sm:$0xff]
    %v174 = vld [vmem:[#allocation8 + $0x200] sm:$0xff]
    %v175 = vld [vmem:[#allocation8 + $0x208] sm:$0xff]
    %v176 = vld [vmem:[#allocation8 + $0x210] sm:$0xff]
    %v177 = vld [vmem:[#allocation8 + $0x218] sm:$0xff]
    %v178 = vld [vmem:[#allocation8 + $0x220] sm:$0xff]
    %v179 = vld [vmem:[#allocation8 + $0x228] sm:$0xff]
    %v180 = vld [vmem:[#allocation8 + $0x230] sm:$0xff]
    %v181 = vld [vmem:[#allocation8 + $0x238] sm:$0xff]
    %v182 = vld [vmem:[#allocation8 + $0x240] sm:$0xff]
    %v183 = vld [vmem:[#allocation8 + $0x248] sm:$0xff]
    %v184 = vld [vmem:[#allocation8 + $0x250] sm:$0xff]
    %v185 = vld [vmem:[#allocation8 + $0x258] sm:$0xff]
    %v186 = vld [vmem:[#allocation8 + $0x260] sm:$0xff]
    %v187 = vld [vmem:[#allocation8 + $0x268] sm:$0xff]
    %v188 = vld [vmem:[#allocation8 + $0x270] sm:$0xff]
    %v189 = vld [vmem:[#allocation8 + $0x278] sm:$0xff]
    %v190 = vld [vmem:[#allocation8 + $0x280] sm:$0xff]
    %v191 = vld [vmem:[#allocation8 + $0x288] sm:$0xff]
    %v192 = vld [vmem:[#allocation8 + $0x290] sm:$0xff]
    %v193 = vld [vmem:[#allocation8 + $0x298] sm:$0xff]
    %v194 = vld [vmem:[#allocation8 + $0x2a0] sm:$0xff]
    %v195 = vld [vmem:[#allocation8 + $0x2a8] sm:$0xff]
    %v196 = vld [vmem:[#allocation8 + $0x2b0] sm:$0xff]
    %v197 = vld [vmem:[#allocation8 + $0x2b8] sm:$0xff]
    %v198 = vld [vmem:[#allocation8 + $0x2c0] sm:$0xff]
    %v199 = vld [vmem:[#allocation8 + $0x2c8] sm:$0xff]
    %v200 = vld [vmem:[#allocation8 + $0x2d0] sm:$0xff]
    %v201 = vld [vmem:[#allocation8 + $0x2d8] sm:$0xff]
    %v202 = vld [vmem:[#allocation8 + $0x2e0] sm:$0xff]
    %v203 = vld [vmem:[#allocation8 + $0x2e8] sm:$0xff]
    %v204 = vld [vmem:[#allocation8 + $0x2f0] sm:$0xff]
    %v205 = vld [vmem:[#allocation8 + $0x2f8] sm:$0xff]
    %v206 = vld [vmem:[#allocation8 + $0x300] sm:$0xff]
    %v207 = vld [vmem:[#allocation8 + $0x308] sm:$0xff]
    %v208 = vld [vmem:[#allocation8 + $0x310] sm:$0xff]
    %v209 = vld [vmem:[#allocation8 + $0x318] sm:$0xff]
    %v210 = vld [vmem:[#allocation8 + $0x320] sm:$0xff]
    %v211 = vld [vmem:[#allocation8 + $0x328] sm:$0xff]
    %v212 = vld [vmem:[#allocation8 + $0x330] sm:$0xff]
    %v213 = vld [vmem:[#allocation8 + $0x338] sm:$0xff]
    %v214 = vld [vmem:[#allocation8 + $0x340] sm:$0xff]
    %v215 = vld [vmem:[#allocation8 + $0x348] sm:$0xff]
    %v216 = vld [vmem:[#allocation8 + $0x350] sm:$0xff]
    %v217 = vld [vmem:[#allocation8 + $0x358] sm:$0xff]
    %v218 = vld [vmem:[#allocation8 + $0x360] sm:$0xff]
    %v219 = vld [vmem:[#allocation8 + $0x368] sm:$0xff]
    %v220 = vld [vmem:[#allocation8 + $0x370] sm:$0xff]
    %v221 = vld [vmem:[#allocation8 + $0x378] sm:$0xff]
    %v222 = vld [vmem:[#allocation8 + $0x380] sm:$0xff]
    %v223 = vld [vmem:[#allocation8 + $0x388] sm:$0xff]
    %v224 = vld [vmem:[#allocation8 + $0x390] sm:$0xff]
    %v225 = vld [vmem:[#allocation8 + $0x398] sm:$0xff]
    %v226 = vld [vmem:[#allocation8 + $0x3a0] sm:$0xff]
    %v227 = vld [vmem:[#allocation8 + $0x3a8] sm:$0xff]
    %v228 = vld [vmem:[#allocation8 + $0x3b0] sm:$0xff]
    %v229 = vld [vmem:[#allocation8 + $0x3b8] sm:$0xff]
    %v230 = vld [vmem:[#allocation8 + $0x3c0] sm:$0xff]
    %v231 = vld [vmem:[#allocation8 + $0x3c8] sm:$0xff]
    %v232 = vld [vmem:[#allocation8 + $0x3d0] sm:$0xff]
    %v233 = vld [vmem:[#allocation8 + $0x3d8] sm:$0xff]
    %v234 = vld [vmem:[#allocation8 + $0x3e0] sm:$0xff]
    %v235 = vld [vmem:[#allocation8 + $0x3e8] sm:$0xff]
    %v236 = vld [vmem:[#allocation8 + $0x3f0] sm:$0xff]
    %v237 = vld [vmem:[#allocation8 + $0x3f8] sm:$0xff]
    %v238 = vld [vmem:[%s4] sm:$0x3]
    %v240 = vlaneseq
    %v241 = vshrl.u32 %v240, 7
    %v242 = vsub.s32 0, %v241
    %v243 = vrot.slane %v238, %v242
    %v244 = vlaneseq
    %v245 = vshrl.u32 %v244, 7
    %v246 = vsub.s32 1, %v245
    %v247 = vrot.slane %v238, %v246
    %v378 = vunpack.c.l.b16 %v110
    %v379 = vunpack.c.h.b16 %v110
    %v380 = vunpack.c.l.b16 %v111
    %v381 = vunpack.c.h.b16 %v111
    %v382 = vunpack.c.l.b16 %v112
    %v383 = vunpack.c.h.b16 %v112
    %v384 = vunpack.c.l.b16 %v113
    %v385 = vunpack.c.h.b16 %v113
    %v386 = vunpack.c.l.b16 %v114
    %v387 = vunpack.c.h.b16 %v114
    %v388 = vunpack.c.l.b16 %v115
    %v389 = vunpack.c.h.b16 %v115
    %v390 = vunpack.c.l.b16 %v116
    %v391 = vunpack.c.h.b16 %v116
    %v392 = vunpack.c.l.b16 %v117
    %v393 = vunpack.c.h.b16 %v117
    %v394 = vunpack.c.l.b16 %v118
    %v395 = vunpack.c.h.b16 %v118
    %v396 = vunpack.c.l.b16 %v119
    %v397 = vunpack.c.h.b16 %v119
    %v398 = vunpack.c.l.b16 %v120
    %v399 = vunpack.c.h.b16 %v120
    %v400 = vunpack.c.l.b16 %v121
    %v401 = vunpack.c.h.b16 %v121
    %v402 = vunpack.c.l.b16 %v122
    %v403 = vunpack.c.h.b16 %v122
    %v404 = vunpack.c.l.b16 %v123
    %v405 = vunpack.c.h.b16 %v123
    %v406 = vunpack.c.l.b16 %v124
    %v407 = vunpack.c.h.b16 %v124
    %v408 = vunpack.c.l.b16 %v125
    %v409 = vunpack.c.h.b16 %v125
    %v410 = vunpack.c.l.b16 %v126
    %v411 = vunpack.c.h.b16 %v126
    %v412 = vunpack.c.l.b16 %v127
    %v413 = vunpack.c.h.b16 %v127
    %v414 = vunpack.c.l.b16 %v128
    %v415 = vunpack.c.h.b16 %v128
    %v416 = vunpack.c.l.b16 %v129
    %v417 = vunpack.c.h.b16 %v129
    %v418 = vunpack.c.l.b16 %v130
    %v419 = vunpack.c.h.b16 %v130
    %v420 = vunpack.c.l.b16 %v131
    %v421 = vunpack.c.h.b16 %v131
    %v422 = vunpack.c.l.b16 %v132
    %v423 = vunpack.c.h.b16 %v132
    %v424 = vunpack.c.l.b16 %v133
    %v425 = vunpack.c.h.b16 %v133
    %v426 = vunpack.c.l.b16 %v134
    %v427 = vunpack.c.h.b16 %v134
    %v428 = vunpack.c.l.b16 %v135
    %v429 = vunpack.c.h.b16 %v135
    %v430 = vunpack.c.l.b16 %v136
    %v431 = vunpack.c.h.b16 %v136
    %v432 = vunpack.c.l.b16 %v137
    %v433 = vunpack.c.h.b16 %v137
    %v434 = vunpack.c.l.b16 %v138
    %v435 = vunpack.c.h.b16 %v138
    %v436 = vunpack.c.l.b16 %v139
    %v437 = vunpack.c.h.b16 %v139
    %v438 = vunpack.c.l.b16 %v140
    %v439 = vunpack.c.h.b16 %v140
    %v440 = vunpack.c.l.b16 %v141
    %v441 = vunpack.c.h.b16 %v141
    %v442 = vunpack.c.l.b16 %v142
    %v443 = vunpack.c.h.b16 %v142
    %v444 = vunpack.c.l.b16 %v143
    %v445 = vunpack.c.h.b16 %v143
    %v446 = vunpack.c.l.b16 %v144
    %v447 = vunpack.c.h.b16 %v144
    %v448 = vunpack.c.l.b16 %v145
    %v449 = vunpack.c.h.b16 %v145
    %v450 = vunpack.c.l.b16 %v146
    %v451 = vunpack.c.h.b16 %v146
    %v452 = vunpack.c.l.b16 %v147
    %v453 = vunpack.c.h.b16 %v147
    %v454 = vunpack.c.l.b16 %v148
    %v455 = vunpack.c.h.b16 %v148
    %v456 = vunpack.c.l.b16 %v149
    %v457 = vunpack.c.h.b16 %v149
    %v458 = vunpack.c.l.b16 %v150
    %v459 = vunpack.c.h.b16 %v150
    %v460 = vunpack.c.l.b16 %v151
    %v461 = vunpack.c.h.b16 %v151
    %v462 = vunpack.c.l.b16 %v152
    %v463 = vunpack.c.h.b16 %v152
    %v464 = vunpack.c.l.b16 %v153
    %v465 = vunpack.c.h.b16 %v153
    %v466 = vunpack.c.l.b16 %v154
    %v467 = vunpack.c.h.b16 %v154
    %v468 = vunpack.c.l.b16 %v155
    %v469 = vunpack.c.h.b16 %v155
    %v470 = vunpack.c.l.b16 %v156
    %v471 = vunpack.c.h.b16 %v156
    %v472 = vunpack.c.l.b16 %v157
    %v473 = vunpack.c.h.b16 %v157
    %v474 = vunpack.c.l.b16 %v158
    %v475 = vunpack.c.h.b16 %v158
    %v476 = vunpack.c.l.b16 %v159
    %v477 = vunpack.c.h.b16 %v159
    %v478 = vunpack.c.l.b16 %v160
    %v479 = vunpack.c.h.b16 %v160
    %v480 = vunpack.c.l.b16 %v161
    %v481 = vunpack.c.h.b16 %v161
    %v482 = vunpack.c.l.b16 %v162
    %v483 = vunpack.c.h.b16 %v162
    %v484 = vunpack.c.l.b16 %v163
    %v485 = vunpack.c.h.b16 %v163
    %v486 = vunpack.c.l.b16 %v164
    %v487 = vunpack.c.h.b16 %v164
    %v488 = vunpack.c.l.b16 %v165
    %v489 = vunpack.c.h.b16 %v165
    %v490 = vunpack.c.l.b16 %v166
    %v491 = vunpack.c.h.b16 %v166
    %v492 = vunpack.c.l.b16 %v167
    %v493 = vunpack.c.h.b16 %v167
    %v494 = vunpack.c.l.b16 %v168
    %v495 = vunpack.c.h.b16 %v168
    %v496 = vunpack.c.l.b16 %v169
    %v497 = vunpack.c.h.b16 %v169
    %v498 = vunpack.c.l.b16 %v170
    %v499 = vunpack.c.h.b16 %v170
    %v500 = vunpack.c.l.b16 %v171
    %v501 = vunpack.c.h.b16 %v171
    %v502 = vunpack.c.l.b16 %v172
    %v503 = vunpack.c.h.b16 %v172
    %v504 = vunpack.c.l.b16 %v173
    %v505 = vunpack.c.h.b16 %v173
    %v506 = vunpack.c.l.b16 %v174
    %v507 = vunpack.c.h.b16 %v174
    %v508 = vunpack.c.l.b16 %v175
    %v509 = vunpack.c.h.b16 %v175
    %v510 = vunpack.c.l.b16 %v176
    %v511 = vunpack.c.h.b16 %v176
    %v512 = vunpack.c.l.b16 %v177
    %v513 = vunpack.c.h.b16 %v177
    %v514 = vunpack.c.l.b16 %v178
    %v515 = vunpack.c.h.b16 %v178
    %v516 = vunpack.c.l.b16 %v179
    %v517 = vunpack.c.h.b16 %v179
    %v518 = vunpack.c.l.b16 %v180
    %v519 = vunpack.c.h.b16 %v180
    %v520 = vunpack.c.l.b16 %v181
    %v521 = vunpack.c.h.b16 %v181
    %v522 = vunpack.c.l.b16 %v182
    %v523 = vunpack.c.h.b16 %v182
    %v524 = vunpack.c.l.b16 %v183
    %v525 = vunpack.c.h.b16 %v183
    %v526 = vunpack.c.l.b16 %v184
    %v527 = vunpack.c.h.b16 %v184
    %v528 = vunpack.c.l.b16 %v185
    %v529 = vunpack.c.h.b16 %v185
    %v530 = vunpack.c.l.b16 %v186
    %v531 = vunpack.c.h.b16 %v186
    %v532 = vunpack.c.l.b16 %v187
    %v533 = vunpack.c.h.b16 %v187
    %v534 = vunpack.c.l.b16 %v188
    %v535 = vunpack.c.h.b16 %v188
    %v536 = vunpack.c.l.b16 %v189
    %v537 = vunpack.c.h.b16 %v189
    %v538 = vunpack.c.l.b16 %v190
    %v539 = vunpack.c.h.b16 %v190
    %v540 = vunpack.c.l.b16 %v191
    %v541 = vunpack.c.h.b16 %v191
    %v542 = vunpack.c.l.b16 %v192
    %v543 = vunpack.c.h.b16 %v192
    %v544 = vunpack.c.l.b16 %v193
    %v545 = vunpack.c.h.b16 %v193
    %v546 = vunpack.c.l.b16 %v194
    %v547 = vunpack.c.h.b16 %v194
    %v548 = vunpack.c.l.b16 %v195
    %v549 = vunpack.c.h.b16 %v195
    %v550 = vunpack.c.l.b16 %v196
    %v551 = vunpack.c.h.b16 %v196
    %v552 = vunpack.c.l.b16 %v197
    %v553 = vunpack.c.h.b16 %v197
    %v554 = vunpack.c.l.b16 %v198
    %v555 = vunpack.c.h.b16 %v198
    %v556 = vunpack.c.l.b16 %v199
    %v557 = vunpack.c.h.b16 %v199
    %v558 = vunpack.c.l.b16 %v200
    %v559 = vunpack.c.h.b16 %v200
    %v560 = vunpack.c.l.b16 %v201
    %v561 = vunpack.c.h.b16 %v201
    %v562 = vunpack.c.l.b16 %v202
    %v563 = vunpack.c.h.b16 %v202
    %v564 = vunpack.c.l.b16 %v203
    %v565 = vunpack.c.h.b16 %v203
    %v566 = vunpack.c.l.b16 %v204
    %v567 = vunpack.c.h.b16 %v204
    %v568 = vunpack.c.l.b16 %v205
    %v569 = vunpack.c.h.b16 %v205
    %v570 = vunpack.c.l.b16 %v206
    %v571 = vunpack.c.h.b16 %v206
    %v572 = vunpack.c.l.b16 %v207
    %v573 = vunpack.c.h.b16 %v207
    %v574 = vunpack.c.l.b16 %v208
    %v575 = vunpack.c.h.b16 %v208
    %v576 = vunpack.c.l.b16 %v209
    %v577 = vunpack.c.h.b16 %v209
    %v578 = vunpack.c.l.b16 %v210
    %v579 = vunpack.c.h.b16 %v210
    %v580 = vunpack.c.l.b16 %v211
    %v581 = vunpack.c.h.b16 %v211
    %v582 = vunpack.c.l.b16 %v212
    %v583 = vunpack.c.h.b16 %v212
    %v584 = vunpack.c.l.b16 %v213
    %v585 = vunpack.c.h.b16 %v213
    %v586 = vunpack.c.l.b16 %v214
    %v587 = vunpack.c.h.b16 %v214
    %v588 = vunpack.c.l.b16 %v215
    %v589 = vunpack.c.h.b16 %v215
    %v590 = vunpack.c.l.b16 %v216
    %v591 = vunpack.c.h.b16 %v216
    %v592 = vunpack.c.l.b16 %v217
    %v593 = vunpack.c.h.b16 %v217
    %v594 = vunpack.c.l.b16 %v218
    %v595 = vunpack.c.h.b16 %v218
    %v596 = vunpack.c.l.b16 %v219
    %v597 = vunpack.c.h.b16 %v219
    %v598 = vunpack.c.l.b16 %v220
    %v599 = vunpack.c.h.b16 %v220
    %v600 = vunpack.c.l.b16 %v221
    %v601 = vunpack.c.h.b16 %v221
    %v602 = vunpack.c.l.b16 %v222
    %v603 = vunpack.c.h.b16 %v222
    %v604 = vunpack.c.l.b16 %v223
    %v605 = vunpack.c.h.b16 %v223
    %v606 = vunpack.c.l.b16 %v224
    %v607 = vunpack.c.h.b16 %v224
    %v608 = vunpack.c.l.b16 %v225
    %v609 = vunpack.c.h.b16 %v225
    %v610 = vunpack.c.l.b16 %v226
    %v611 = vunpack.c.h.b16 %v226
    %v612 = vunpack.c.l.b16 %v227
    %v613 = vunpack.c.h.b16 %v227
    %v614 = vunpack.c.l.b16 %v228
    %v615 = vunpack.c.h.b16 %v228
    %v616 = vunpack.c.l.b16 %v229
    %v617 = vunpack.c.h.b16 %v229
    %v618 = vunpack.c.l.b16 %v230
    %v619 = vunpack.c.h.b16 %v230
    %v620 = vunpack.c.l.b16 %v231
    %v621 = vunpack.c.h.b16 %v231
    %v622 = vunpack.c.l.b16 %v232
    %v623 = vunpack.c.h.b16 %v232
    %v624 = vunpack.c.l.b16 %v233
    %v625 = vunpack.c.h.b16 %v233
    %v626 = vunpack.c.l.b16 %v234
    %v627 = vunpack.c.h.b16 %v234
    %v628 = vunpack.c.l.b16 %v235
    %v629 = vunpack.c.h.b16 %v235
    %v630 = vunpack.c.l.b16 %v236
    %v631 = vunpack.c.h.b16 %v236
    %v632 = vunpack.c.l.b16 %v237
    %v633 = vunpack.c.h.b16 %v237
    %v634 = vpack.c.b16 %v380, %v378
    %v635 = vpack.c.b16 %v381, %v379
    %v636 = vpack.c.b16 %v384, %v382
    %v637 = vpack.c.b16 %v385, %v383
    %v638 = vpack.c.b16 %v388, %v386
    %v639 = vpack.c.b16 %v389, %v387
    %v640 = vpack.c.b16 %v392, %v390
    %v641 = vpack.c.b16 %v393, %v391
    %v642 = vpack.c.b16 %v396, %v394
    %v643 = vpack.c.b16 %v397, %v395
    %v644 = vpack.c.b16 %v400, %v398
    %v645 = vpack.c.b16 %v401, %v399
    %v646 = vpack.c.b16 %v404, %v402
    %v647 = vpack.c.b16 %v405, %v403
    %v648 = vpack.c.b16 %v408, %v406
    %v649 = vpack.c.b16 %v409, %v407
    %v650 = vpack.c.b16 %v412, %v410
    %v651 = vpack.c.b16 %v413, %v411
    %v652 = vpack.c.b16 %v416, %v414
    %v653 = vpack.c.b16 %v417, %v415
    %v654 = vpack.c.b16 %v420, %v418
    %v655 = vpack.c.b16 %v421, %v419
    %v656 = vpack.c.b16 %v424, %v422
    %v657 = vpack.c.b16 %v425, %v423
    %v658 = vpack.c.b16 %v428, %v426
    %v659 = vpack.c.b16 %v429, %v427
    %v660 = vpack.c.b16 %v432, %v430
    %v661 = vpack.c.b16 %v433, %v431
    %v662 = vpack.c.b16 %v436, %v434
    %v663 = vpack.c.b16 %v437, %v435
    %v664 = vpack.c.b16 %v440, %v438
    %v665 = vpack.c.b16 %v441, %v439
    %v666 = vpack.c.b16 %v444, %v442
    %v667 = vpack.c.b16 %v445, %v443
    %v668 = vpack.c.b16 %v448, %v446
    %v669 = vpack.c.b16 %v449, %v447
    %v670 = vpack.c.b16 %v452, %v450
    %v671 = vpack.c.b16 %v453, %v451
    %v672 = vpack.c.b16 %v456, %v454
    %v673 = vpack.c.b16 %v457, %v455
    %v674 = vpack.c.b16 %v460, %v458
    %v675 = vpack.c.b16 %v461, %v459
    %v676 = vpack.c.b16 %v464, %v462
    %v677 = vpack.c.b16 %v465, %v463
    %v678 = vpack.c.b16 %v468, %v466
    %v679 = vpack.c.b16 %v469, %v467
    %v680 = vpack.c.b16 %v472, %v470
    %v681 = vpack.c.b16 %v473, %v471
    %v682 = vpack.c.b16 %v476, %v474
    %v683 = vpack.c.b16 %v477, %v475
    %v684 = vpack.c.b16 %v480, %v478
    %v685 = vpack.c.b16 %v481, %v479
    %v686 = vpack.c.b16 %v484, %v482
    %v687 = vpack.c.b16 %v485, %v483
    %v688 = vpack.c.b16 %v488, %v486
    %v689 = vpack.c.b16 %v489, %v487
    %v690 = vpack.c.b16 %v492, %v490
    %v691 = vpack.c.b16 %v493, %v491
    %v692 = vpack.c.b16 %v496, %v494
    %v693 = vpack.c.b16 %v497, %v495
    %v694 = vpack.c.b16 %v500, %v498
    %v695 = vpack.c.b16 %v501, %v499
    %v696 = vpack.c.b16 %v504, %v502
    %v697 = vpack.c.b16 %v505, %v503
    %v698 = vpack.c.b16 %v508, %v506
    %v699 = vpack.c.b16 %v509, %v507
    %v700 = vpack.c.b16 %v512, %v510
    %v701 = vpack.c.b16 %v513, %v511
    %v702 = vpack.c.b16 %v516, %v514
    %v703 = vpack.c.b16 %v517, %v515
    %v704 = vpack.c.b16 %v520, %v518
    %v705 = vpack.c.b16 %v521, %v519
    %v706 = vpack.c.b16 %v524, %v522
    %v707 = vpack.c.b16 %v525, %v523
    %v708 = vpack.c.b16 %v528, %v526
    %v709 = vpack.c.b16 %v529, %v527
    %v710 = vpack.c.b16 %v532, %v530
    %v711 = vpack.c.b16 %v533, %v531
    %v712 = vpack.c.b16 %v536, %v534
    %v713 = vpack.c.b16 %v537, %v535
    %v714 = vpack.c.b16 %v540, %v538
    %v715 = vpack.c.b16 %v541, %v539
    %v716 = vpack.c.b16 %v544, %v542
    %v717 = vpack.c.b16 %v545, %v543
    %v718 = vpack.c.b16 %v548, %v546
    %v719 = vpack.c.b16 %v549, %v547
    %v720 = vpack.c.b16 %v552, %v550
    %v721 = vpack.c.b16 %v553, %v551
    %v722 = vpack.c.b16 %v556, %v554
    %v723 = vpack.c.b16 %v557, %v555
    %v724 = vpack.c.b16 %v560, %v558
    %v725 = vpack.c.b16 %v561, %v559
    %v726 = vpack.c.b16 %v564, %v562
    %v727 = vpack.c.b16 %v565, %v563
    %v728 = vpack.c.b16 %v568, %v566
    %v729 = vpack.c.b16 %v569, %v567
    %v730 = vpack.c.b16 %v572, %v570
    %v731 = vpack.c.b16 %v573, %v571
    %v732 = vpack.c.b16 %v576, %v574
    %v733 = vpack.c.b16 %v577, %v575
    %v734 = vpack.c.b16 %v580, %v578
    %v735 = vpack.c.b16 %v581, %v579
    %v736 = vpack.c.b16 %v584, %v582
    %v737 = vpack.c.b16 %v585, %v583
    %v738 = vpack.c.b16 %v588, %v586
    %v739 = vpack.c.b16 %v589, %v587
    %v740 = vpack.c.b16 %v592, %v590
    %v741 = vpack.c.b16 %v593, %v591
    %v742 = vpack.c.b16 %v596, %v594
    %v743 = vpack.c.b16 %v597, %v595
    %v744 = vpack.c.b16 %v600, %v598
    %v745 = vpack.c.b16 %v601, %v599
    %v746 = vpack.c.b16 %v604, %v602
    %v747 = vpack.c.b16 %v605, %v603
    %v748 = vpack.c.b16 %v608, %v606
    %v749 = vpack.c.b16 %v609, %v607
    %v750 = vpack.c.b16 %v612, %v610
    %v751 = vpack.c.b16 %v613, %v611
    %v752 = vpack.c.b16 %v616, %v614
    %v753 = vpack.c.b16 %v617, %v615
    %v754 = vpack.c.b16 %v620, %v618
    %v755 = vpack.c.b16 %v621, %v619
    %v756 = vpack.c.b16 %v624, %v622
    %v757 = vpack.c.b16 %v625, %v623
    %v758 = vpack.c.b16 %v628, %v626
    %v759 = vpack.c.b16 %v629, %v627
    %v760 = vpack.c.b16 %v632, %v630
    %v761 = vpack.c.b16 %v633, %v631
    %890 = vmatprep.subr.bf16.mxu0 %v649
    %891 = vmatpush1.bf16.msra.mxu0 %v648
    %892 = vmatprep.subr.bf16.mxu0 %v647
    %893 = vmatpush1.bf16.msra.mxu0 %v646
    %894 = vmatprep.subr.bf16.mxu0 %v645
    %895 = vmatpush1.bf16.msra.mxu0 %v644
    %896 = vmatprep.subr.bf16.mxu0 %v643
    %897 = vmatpush1.bf16.msra.mxu0 %v642
    %898 = vmatprep.subr.bf16.mxu0 %v641
    %899 = vmatpush1.bf16.msra.mxu0 %v640
    %900 = vmatprep.subr.bf16.mxu0 %v639
    %901 = vmatpush1.bf16.msra.mxu0 %v638
    %902 = vmatprep.subr.bf16.mxu0 %v637
    %903 = vmatpush1.bf16.msra.mxu0 %v636
    %904 = vmatprep.subr.bf16.mxu0 %v635
    %905 = vmatpush1.bf16.msra.mxu0 %v634
    %906 = vmatprep.subr.bf16.mxu0 %v665
    %907 = vmatpush2.bf16.msra.mxu0 %v664
    %908 = vmatprep.subr.bf16.mxu0 %v663
    %909 = vmatpush2.bf16.msra.mxu0 %v662
    %910 = vmatprep.subr.bf16.mxu0 %v661
    %911 = vmatpush2.bf16.msra.mxu0 %v660
    %912 = vmatprep.subr.bf16.mxu0 %v659
    %913 = vmatpush2.bf16.msra.mxu0 %v658
    %914 = vmatprep.subr.bf16.mxu0 %v657
    %915 = vmatpush2.bf16.msra.mxu0 %v656
    %916 = vmatprep.subr.bf16.mxu0 %v655
    %917 = vmatpush2.bf16.msra.mxu0 %v654
    %918 = vmatprep.subr.bf16.mxu0 %v653
    %919 = vmatpush2.bf16.msra.mxu0 %v652
    %920 = vmatprep.subr.bf16.mxu0 %v651
    %921 = vmatpush2.bf16.msra.mxu0 %v650
    %922 = vmatprep.mubr.bf16.mxu0 %v103
    %923 = vmatmul.mubr.bf16.gmra.mxu0 %v102
    %v924 = vpop.f32.mrf.mxu0
    %v925 = vadd.f32 %v243, %v924
    %v926 = vpop.f32.mrf.mxu0
    %v927 = vadd.f32 %v247, %v926
    %v928 = vpop.f32.mrf.mxu0
    %v929 = vpop.f32.mrf.mxu0
    %930 = vdwg.mxu0
    %931 = vmatprep.subr.bf16.mxu0 %v681
    %932 = vmatpush1.bf16.msra.mxu0 %v680
    %933 = vmatprep.subr.bf16.mxu0 %v679
    %934 = vmatpush1.bf16.msra.mxu0 %v678
    %935 = vmatprep.subr.bf16.mxu0 %v677
    %936 = vmatpush1.bf16.msra.mxu0 %v676
    %937 = vmatprep.subr.bf16.mxu0 %v675
    %938 = vmatpush1.bf16.msra.mxu0 %v674
    %939 = vmatprep.subr.bf16.mxu0 %v673
    %940 = vmatpush1.bf16.msra.mxu0 %v672
    %941 = vmatprep.subr.bf16.mxu0 %v671
    %942 = vmatpush1.bf16.msra.mxu0 %v670
    %943 = vmatprep.subr.bf16.mxu0 %v669
    %944 = vmatpush1.bf16.msra.mxu0 %v668
    %945 = vmatprep.subr.bf16.mxu0 %v667
    %946 = vmatpush1.bf16.msra.mxu0 %v666
    %947 = vmatprep.subr.bf16.mxu0 %v697
    %948 = vmatpush2.bf16.msra.mxu0 %v696
    %949 = vmatprep.subr.bf16.mxu0 %v695
    %950 = vmatpush2.bf16.msra.mxu0 %v694
    %951 = vmatprep.subr.bf16.mxu0 %v693
    %952 = vmatpush2.bf16.msra.mxu0 %v692
    %953 = vmatprep.subr.bf16.mxu0 %v691
    %954 = vmatpush2.bf16.msra.mxu0 %v690
    %955 = vmatprep.subr.bf16.mxu0 %v689
    %956 = vmatpush2.bf16.msra.mxu0 %v688
    %957 = vmatprep.subr.bf16.mxu0 %v687
    %958 = vmatpush2.bf16.msra.mxu0 %v686
    %959 = vmatprep.subr.bf16.mxu0 %v685
    %960 = vmatpush2.bf16.msra.mxu0 %v684
    %961 = vmatprep.subr.bf16.mxu0 %v683
    %962 = vmatpush2.bf16.msra.mxu0 %v682
    %963 = vmatprep.mubr.bf16.mxu0 %v105
    %964 = vmatmul.mubr.bf16.gmra.mxu0 %v104
    %v965 = vpop.f32.mrf.mxu0
    %v966 = vadd.f32 %v925, %v965
    %v967 = vpop.f32.mrf.mxu0
    %v968 = vadd.f32 %v927, %v967
    %v969 = vpop.f32.mrf.mxu0
    %v970 = vpop.f32.mrf.mxu0
    %971 = vdwg.mxu0
    %972 = vmatprep.subr.bf16.mxu0 %v713
    %973 = vmatpush1.bf16.msra.mxu0 %v712
    %974 = vmatprep.subr.bf16.mxu0 %v711
    %975 = vmatpush1.bf16.msra.mxu0 %v710
    %976 = vmatprep.subr.bf16.mxu0 %v709
    %977 = vmatpush1.bf16.msra.mxu0 %v708
    %978 = vmatprep.subr.bf16.mxu0 %v707
    %979 = vmatpush1.bf16.msra.mxu0 %v706
    %980 = vmatprep.subr.bf16.mxu0 %v705
    %981 = vmatpush1.bf16.msra.mxu0 %v704
    %982 = vmatprep.subr.bf16.mxu0 %v703
    %983 = vmatpush1.bf16.msra.mxu0 %v702
    %984 = vmatprep.subr.bf16.mxu0 %v701
    %985 = vmatpush1.bf16.msra.mxu0 %v700
    %986 = vmatprep.subr.bf16.mxu0 %v699
    %987 = vmatpush1.bf16.msra.mxu0 %v698
    %988 = vmatprep.subr.bf16.mxu0 %v729
    %989 = vmatpush2.bf16.msra.mxu0 %v728
    %990 = vmatprep.subr.bf16.mxu0 %v727
    %991 = vmatpush2.bf16.msra.mxu0 %v726
    %992 = vmatprep.subr.bf16.mxu0 %v725
    %993 = vmatpush2.bf16.msra.mxu0 %v724
    %994 = vmatprep.subr.bf16.mxu0 %v723
    %995 = vmatpush2.bf16.msra.mxu0 %v722
    %996 = vmatprep.subr.bf16.mxu0 %v721
    %997 = vmatpush2.bf16.msra.mxu0 %v720
    %998 = vmatprep.subr.bf16.mxu0 %v719
    %999 = vmatpush2.bf16.msra.mxu0 %v718
    %1000 = vmatprep.subr.bf16.mxu0 %v717
    %1001 = vmatpush2.bf16.msra.mxu0 %v716
    %1002 = vmatprep.subr.bf16.mxu0 %v715
    %1003 = vmatpush2.bf16.msra.mxu0 %v714
    %1004 = vmatprep.mubr.bf16.mxu0 %v107
    %1005 = vmatmul.mubr.bf16.gmra.mxu0 %v106
    %v1006 = vpop.f32.mrf.mxu0
    %v1007 = vadd.f32 %v966, %v1006
    %v1008 = vpop.f32.mrf.mxu0
    %v1009 = vadd.f32 %v968, %v1008
    %v1010 = vpop.f32.mrf.mxu0
    %v1011 = vpop.f32.mrf.mxu0
    %1012 = vdwg.mxu0
    %1013 = vmatprep.subr.bf16.mxu0 %v745
    %1014 = vmatpush1.bf16.msra.mxu0 %v744
    %1015 = vmatprep.subr.bf16.mxu0 %v743
    %1016 = vmatpush1.bf16.msra.mxu0 %v742
    %1017 = vmatprep.subr.bf16.mxu0 %v741
    %1018 = vmatpush1.bf16.msra.mxu0 %v740
    %1019 = vmatprep.subr.bf16.mxu0 %v739
    %1020 = vmatpush1.bf16.msra.mxu0 %v738
    %1021 = vmatprep.subr.bf16.mxu0 %v737
    %1022 = vmatpush1.bf16.msra.mxu0 %v736
    %1023 = vmatprep.subr.bf16.mxu0 %v735
    %1024 = vmatpush1.bf16.msra.mxu0 %v734
    %1025 = vmatprep.subr.bf16.mxu0 %v733
    %1026 = vmatpush1.bf16.msra.mxu0 %v732
    %1027 = vmatprep.subr.bf16.mxu0 %v731
    %1028 = vmatpush1.bf16.msra.mxu0 %v730
    %1029 = vmatprep.subr.bf16.mxu0 %v761
    %1030 = vmatpush2.bf16.msra.mxu0 %v760
    %1031 = vmatprep.subr.bf16.mxu0 %v759
    %1032 = vmatpush2.bf16.msra.mxu0 %v758
    %1033 = vmatprep.subr.bf16.mxu0 %v757
    %1034 = vmatpush2.bf16.msra.mxu0 %v756
    %1035 = vmatprep.subr.bf16.mxu0 %v755
    %1036 = vmatpush2.bf16.msra.mxu0 %v754
    %1037 = vmatprep.subr.bf16.mxu0 %v753
    %1038 = vmatpush2.bf16.msra.mxu0 %v752
    %1039 = vmatprep.subr.bf16.mxu0 %v751
    %1040 = vmatpush2.bf16.msra.mxu0 %v750
    %1041 = vmatprep.subr.bf16.mxu0 %v749
    %1042 = vmatpush2.bf16.msra.mxu0 %v748
    %1043 = vmatprep.subr.bf16.mxu0 %v747
    %1044 = vmatpush2.bf16.msra.mxu0 %v746
    %1045 = vmatprep.mubr.bf16.mxu0 %v109
    %1046 = vmatmul.mubr.bf16.gmra.mxu0 %v108
    %v1047 = vpop.f32.mrf.mxu0
    %v1048 = vadd.f32 %v1007, %v1047
    %v1049 = vpop.f32.mrf.mxu0
    %v1050 = vadd.f32 %v1009, %v1049
    %v1051 = vpop.f32.mrf.mxu0
    %v1052 = vpop.f32.mrf.mxu0
    %1053 = vdwg.mxu0
    %v1054 = vmul.f32 %v1050, 0.5
    %v1055 = vmul.f32 %v1054, 1.442695
    %v1056 = vpow.pop %v1055
    %v1057 = vld [vmem:[#allocation5] sm:$0xff]
    %v1058 = vmul.f32 %v1056, %v1057
    %v1059 = vadd.f32 %v1048, %v1058
    %1060 = vst [vmem:[#allocation12] sm:$0xff] %v1059
    %v1061 = vpack.c.bf16 %v1059, %v1059
    %v1062 = vld [vmem:[#allocation10] sm:$0xff]
    %v1063 = vld [vmem:[#allocation10 + $0x8] sm:$0xff]
    %v1064 = vld [vmem:[#allocation10 + $0x10] sm:$0xff]
    %v1065 = vld [vmem:[#allocation10 + $0x18] sm:$0xff]
    %v1066 = vld [vmem:[#allocation10 + $0x20] sm:$0xff]
    %v1067 = vld [vmem:[#allocation10 + $0x28] sm:$0xff]
    %v1068 = vld [vmem:[#allocation10 + $0x30] sm:$0xff]
    %v1069 = vld [vmem:[#allocation10 + $0x38] sm:$0xff]
    %v1070 = vld [vmem:[#allocation10 + $0x40] sm:$0xff]
    %v1071 = vld [vmem:[#allocation10 + $0x48] sm:$0xff]
    %v1072 = vld [vmem:[#allocation10 + $0x50] sm:$0xff]
    %v1073 = vld [vmem:[#allocation10 + $0x58] sm:$0xff]
    %v1074 = vld [vmem:[#allocation10 + $0x60] sm:$0xff]
    %v1075 = vld [vmem:[#allocation10 + $0x68] sm:$0xff]
    %v1076 = vld [vmem:[#allocation10 + $0x70] sm:$0xff]
    %v1077 = vld [vmem:[#allocation10 + $0x78] sm:$0xff]
    %v1078 = vld [vmem:[#allocation10 + $0x80] sm:$0xff]
    %v1079 = vld [vmem:[#allocation10 + $0x88] sm:$0xff]
    %v1080 = vld [vmem:[#allocation10 + $0x90] sm:$0xff]
    %v1081 = vld [vmem:[#allocation10 + $0x98] sm:$0xff]
    %v1082 = vld [vmem:[#allocation10 + $0xa0] sm:$0xff]
    %v1083 = vld [vmem:[#allocation10 + $0xa8] sm:$0xff]
    %v1084 = vld [vmem:[#allocation10 + $0xb0] sm:$0xff]
    %v1085 = vld [vmem:[#allocation10 + $0xb8] sm:$0xff]
    %v1086 = vld [vmem:[#allocation10 + $0xc0] sm:$0xff]
    %v1087 = vld [vmem:[#allocation10 + $0xc8] sm:$0xff]
    %v1088 = vld [vmem:[#allocation10 + $0xd0] sm:$0xff]
    %v1089 = vld [vmem:[#allocation10 + $0xd8] sm:$0xff]
    %v1090 = vld [vmem:[#allocation10 + $0xe0] sm:$0xff]
    %v1091 = vld [vmem:[#allocation10 + $0xe8] sm:$0xff]
    %v1092 = vld [vmem:[#allocation10 + $0xf0] sm:$0xff]
    %v1093 = vld [vmem:[#allocation10 + $0xf8] sm:$0xff]
    %v1094 = vld [vmem:[#allocation10 + $0x100] sm:$0xff]
    %v1095 = vld [vmem:[#allocation10 + $0x108] sm:$0xff]
    %v1096 = vld [vmem:[#allocation10 + $0x110] sm:$0xff]
    %v1097 = vld [vmem:[#allocation10 + $0x118] sm:$0xff]
    %v1098 = vld [vmem:[#allocation10 + $0x120] sm:$0xff]
    %v1099 = vld [vmem:[#allocation10 + $0x128] sm:$0xff]
    %v1100 = vld [vmem:[#allocation10 + $0x130] sm:$0xff]
    %v1101 = vld [vmem:[#allocation10 + $0x138] sm:$0xff]
    %v1102 = vld [vmem:[#allocation10 + $0x140] sm:$0xff]
    %v1103 = vld [vmem:[#allocation10 + $0x148] sm:$0xff]
    %v1104 = vld [vmem:[#allocation10 + $0x150] sm:$0xff]
    %v1105 = vld [vmem:[#allocation10 + $0x158] sm:$0xff]
    %v1106 = vld [vmem:[#allocation10 + $0x160] sm:$0xff]
    %v1107 = vld [vmem:[#allocation10 + $0x168] sm:$0xff]
    %v1108 = vld [vmem:[#allocation10 + $0x170] sm:$0xff]
    %v1109 = vld [vmem:[#allocation10 + $0x178] sm:$0xff]
    %v1110 = vld [vmem:[#allocation10 + $0x180] sm:$0xff]
    %v1111 = vld [vmem:[#allocation10 + $0x188] sm:$0xff]
    %v1112 = vld [vmem:[#allocation10 + $0x190] sm:$0xff]
    %v1113 = vld [vmem:[#allocation10 + $0x198] sm:$0xff]
    %v1114 = vld [vmem:[#allocation10 + $0x1a0] sm:$0xff]
    %v1115 = vld [vmem:[#allocation10 + $0x1a8] sm:$0xff]
    %v1116 = vld [vmem:[#allocation10 + $0x1b0] sm:$0xff]
    %v1117 = vld [vmem:[#allocation10 + $0x1b8] sm:$0xff]
    %v1118 = vld [vmem:[#allocation10 + $0x1c0] sm:$0xff]
    %v1119 = vld [vmem:[#allocation10 + $0x1c8] sm:$0xff]
    %v1120 = vld [vmem:[#allocation10 + $0x1d0] sm:$0xff]
    %v1121 = vld [vmem:[#allocation10 + $0x1d8] sm:$0xff]
    %v1122 = vld [vmem:[#allocation10 + $0x1e0] sm:$0xff]
    %v1123 = vld [vmem:[#allocation10 + $0x1e8] sm:$0xff]
    %v1124 = vld [vmem:[#allocation10 + $0x1f0] sm:$0xff]
    %v1125 = vld [vmem:[#allocation10 + $0x1f8] sm:$0xff]
    %v1126 = vld [vmem:[%s6] sm:$0xff]
    %v1128 = vlaneseq
    %v1129 = vshrl.u32 %v1128, 7
    %v1130 = vsub.s32 0, %v1129
    %v1131 = vrot.slane %v1126, %v1130
    %v1132 = vlaneseq
    %v1133 = vshrl.u32 %v1132, 7
    %v1134 = vsub.s32 1, %v1133
    %v1135 = vrot.slane %v1126, %v1134
    %v1136 = vlaneseq
    %v1137 = vshrl.u32 %v1136, 7
    %v1138 = vsub.s32 2, %v1137
    %v1139 = vrot.slane %v1126, %v1138
    %v1140 = vlaneseq
    %v1141 = vshrl.u32 %v1140, 7
    %v1142 = vsub.s32 3, %v1141
    %v1143 = vrot.slane %v1126, %v1142
    %v1144 = vlaneseq
    %v1145 = vshrl.u32 %v1144, 7
    %v1146 = vsub.s32 4, %v1145
    %v1147 = vrot.slane %v1126, %v1146
    %v1148 = vlaneseq
    %v1149 = vshrl.u32 %v1148, 7
    %v1150 = vsub.s32 5, %v1149
    %v1151 = vrot.slane %v1126, %v1150
    %v1152 = vlaneseq
    %v1153 = vshrl.u32 %v1152, 7
    %v1154 = vsub.s32 6, %v1153
    %v1155 = vrot.slane %v1126, %v1154
    %v1156 = vlaneseq
    %v1157 = vshrl.u32 %v1156, 7
    %v1158 = vsub.s32 7, %v1157
    %v1159 = vrot.slane %v1126, %v1158
    %v1232 = vunpack.c.l.b16 %v1062
    %v1233 = vunpack.c.h.b16 %v1062
    %v1234 = vunpack.c.l.b16 %v1063
    %v1235 = vunpack.c.h.b16 %v1063
    %v1236 = vunpack.c.l.b16 %v1064
    %v1237 = vunpack.c.h.b16 %v1064
    %v1238 = vunpack.c.l.b16 %v1065
    %v1239 = vunpack.c.h.b16 %v1065
    %v1240 = vunpack.c.l.b16 %v1066
    %v1241 = vunpack.c.h.b16 %v1066
    %v1242 = vunpack.c.l.b16 %v1067
    %v1243 = vunpack.c.h.b16 %v1067
    %v1244 = vunpack.c.l.b16 %v1068
    %v1245 = vunpack.c.h.b16 %v1068
    %v1246 = vunpack.c.l.b16 %v1069
    %v1247 = vunpack.c.h.b16 %v1069
    %v1248 = vunpack.c.l.b16 %v1070
    %v1249 = vunpack.c.h.b16 %v1070
    %v1250 = vunpack.c.l.b16 %v1071
    %v1251 = vunpack.c.h.b16 %v1071
    %v1252 = vunpack.c.l.b16 %v1072
    %v1253 = vunpack.c.h.b16 %v1072
    %v1254 = vunpack.c.l.b16 %v1073
    %v1255 = vunpack.c.h.b16 %v1073
    %v1256 = vunpack.c.l.b16 %v1074
    %v1257 = vunpack.c.h.b16 %v1074
    %v1258 = vunpack.c.l.b16 %v1075
    %v1259 = vunpack.c.h.b16 %v1075
    %v1260 = vunpack.c.l.b16 %v1076
    %v1261 = vunpack.c.h.b16 %v1076
    %v1262 = vunpack.c.l.b16 %v1077
    %v1263 = vunpack.c.h.b16 %v1077
    %v1264 = vunpack.c.l.b16 %v1078
    %v1265 = vunpack.c.h.b16 %v1078
    %v1266 = vunpack.c.l.b16 %v1079
    %v1267 = vunpack.c.h.b16 %v1079
    %v1268 = vunpack.c.l.b16 %v1080
    %v1269 = vunpack.c.h.b16 %v1080
    %v1270 = vunpack.c.l.b16 %v1081
    %v1271 = vunpack.c.h.b16 %v1081
    %v1272 = vunpack.c.l.b16 %v1082
    %v1273 = vunpack.c.h.b16 %v1082
    %v1274 = vunpack.c.l.b16 %v1083
    %v1275 = vunpack.c.h.b16 %v1083
    %v1276 = vunpack.c.l.b16 %v1084
    %v1277 = vunpack.c.h.b16 %v1084
    %v1278 = vunpack.c.l.b16 %v1085
    %v1279 = vunpack.c.h.b16 %v1085
    %v1280 = vunpack.c.l.b16 %v1086
    %v1281 = vunpack.c.h.b16 %v1086
    %v1282 = vunpack.c.l.b16 %v1087
    %v1283 = vunpack.c.h.b16 %v1087
    %v1284 = vunpack.c.l.b16 %v1088
    %v1285 = vunpack.c.h.b16 %v1088
    %v1286 = vunpack.c.l.b16 %v1089
    %v1287 = vunpack.c.h.b16 %v1089
    %v1288 = vunpack.c.l.b16 %v1090
    %v1289 = vunpack.c.h.b16 %v1090
    %v1290 = vunpack.c.l.b16 %v1091
    %v1291 = vunpack.c.h.b16 %v1091
    %v1292 = vunpack.c.l.b16 %v1092
    %v1293 = vunpack.c.h.b16 %v1092
    %v1294 = vunpack.c.l.b16 %v1093
    %v1295 = vunpack.c.h.b16 %v1093
    %v1296 = vunpack.c.l.b16 %v1094
    %v1297 = vunpack.c.h.b16 %v1094
    %v1298 = vunpack.c.l.b16 %v1095
    %v1299 = vunpack.c.h.b16 %v1095
    %v1300 = vunpack.c.l.b16 %v1096
    %v1301 = vunpack.c.h.b16 %v1096
    %v1302 = vunpack.c.l.b16 %v1097
    %v1303 = vunpack.c.h.b16 %v1097
    %v1304 = vunpack.c.l.b16 %v1098
    %v1305 = vunpack.c.h.b16 %v1098
    %v1306 = vunpack.c.l.b16 %v1099
    %v1307 = vunpack.c.h.b16 %v1099
    %v1308 = vunpack.c.l.b16 %v1100
    %v1309 = vunpack.c.h.b16 %v1100
    %v1310 = vunpack.c.l.b16 %v1101
    %v1311 = vunpack.c.h.b16 %v1101
    %v1312 = vunpack.c.l.b16 %v1102
    %v1313 = vunpack.c.h.b16 %v1102
    %v1314 = vunpack.c.l.b16 %v1103
    %v1315 = vunpack.c.h.b16 %v1103
    %v1316 = vunpack.c.l.b16 %v1104
    %v1317 = vunpack.c.h.b16 %v1104
    %v1318 = vunpack.c.l.b16 %v1105
    %v1319 = vunpack.c.h.b16 %v1105
    %v1320 = vunpack.c.l.b16 %v1106
    %v1321 = vunpack.c.h.b16 %v1106
    %v1322 = vunpack.c.l.b16 %v1107
    %v1323 = vunpack.c.h.b16 %v1107
    %v1324 = vunpack.c.l.b16 %v1108
    %v1325 = vunpack.c.h.b16 %v1108
    %v1326 = vunpack.c.l.b16 %v1109
    %v1327 = vunpack.c.h.b16 %v1109
    %v1328 = vunpack.c.l.b16 %v1110
    %v1329 = vunpack.c.h.b16 %v1110
    %v1330 = vunpack.c.l.b16 %v1111
    %v1331 = vunpack.c.h.b16 %v1111
    %v1332 = vunpack.c.l.b16 %v1112
    %v1333 = vunpack.c.h.b16 %v1112
    %v1334 = vunpack.c.l.b16 %v1113
    %v1335 = vunpack.c.h.b16 %v1113
    %v1336 = vunpack.c.l.b16 %v1114
    %v1337 = vunpack.c.h.b16 %v1114
    %v1338 = vunpack.c.l.b16 %v1115
    %v1339 = vunpack.c.h.b16 %v1115
    %v1340 = vunpack.c.l.b16 %v1116
    %v1341 = vunpack.c.h.b16 %v1116
    %v1342 = vunpack.c.l.b16 %v1117
    %v1343 = vunpack.c.h.b16 %v1117
    %v1344 = vunpack.c.l.b16 %v1118
    %v1345 = vunpack.c.h.b16 %v1118
    %v1346 = vunpack.c.l.b16 %v1119
    %v1347 = vunpack.c.h.b16 %v1119
    %v1348 = vunpack.c.l.b16 %v1120
    %v1349 = vunpack.c.h.b16 %v1120
    %v1350 = vunpack.c.l.b16 %v1121
    %v1351 = vunpack.c.h.b16 %v1121
    %v1352 = vunpack.c.l.b16 %v1122
    %v1353 = vunpack.c.h.b16 %v1122
    %v1354 = vunpack.c.l.b16 %v1123
    %v1355 = vunpack.c.h.b16 %v1123
    %v1356 = vunpack.c.l.b16 %v1124
    %v1357 = vunpack.c.h.b16 %v1124
    %v1358 = vunpack.c.l.b16 %v1125
    %v1359 = vunpack.c.h.b16 %v1125
    %v1360 = vpack.c.b16 %v1240, %v1232
    %v1361 = vpack.c.b16 %v1241, %v1233
    %v1362 = vpack.c.b16 %v1242, %v1234
    %v1363 = vpack.c.b16 %v1243, %v1235
    %v1364 = vpack.c.b16 %v1244, %v1236
    %v1365 = vpack.c.b16 %v1245, %v1237
    %v1366 = vpack.c.b16 %v1246, %v1238
    %v1367 = vpack.c.b16 %v1247, %v1239
    %v1368 = vpack.c.b16 %v1256, %v1248
    %v1369 = vpack.c.b16 %v1257, %v1249
    %v1370 = vpack.c.b16 %v1258, %v1250
    %v1371 = vpack.c.b16 %v1259, %v1251
    %v1372 = vpack.c.b16 %v1260, %v1252
    %v1373 = vpack.c.b16 %v1261, %v1253
    %v1374 = vpack.c.b16 %v1262, %v1254
    %v1375 = vpack.c.b16 %v1263, %v1255
    %v1376 = vpack.c.b16 %v1272, %v1264
    %v1377 = vpack.c.b16 %v1273, %v1265
    %v1378 = vpack.c.b16 %v1274, %v1266
    %v1379 = vpack.c.b16 %v1275, %v1267
    %v1380 = vpack.c.b16 %v1276, %v1268
    %v1381 = vpack.c.b16 %v1277, %v1269
    %v1382 = vpack.c.b16 %v1278, %v1270
    %v1383 = vpack.c.b16 %v1279, %v1271
    %v1384 = vpack.c.b16 %v1288, %v1280
    %v1385 = vpack.c.b16 %v1289, %v1281
    %v1386 = vpack.c.b16 %v1290, %v1282
    %v1387 = vpack.c.b16 %v1291, %v1283
    %v1388 = vpack.c.b16 %v1292, %v1284
    %v1389 = vpack.c.b16 %v1293, %v1285
    %v1390 = vpack.c.b16 %v1294, %v1286
    %v1391 = vpack.c.b16 %v1295, %v1287
    %v1392 = vpack.c.b16 %v1304, %v1296
    %v1393 = vpack.c.b16 %v1305, %v1297
    %v1394 = vpack.c.b16 %v1306, %v1298
    %v1395 = vpack.c.b16 %v1307, %v1299
    %v1396 = vpack.c.b16 %v1308, %v1300
    %v1397 = vpack.c.b16 %v1309, %v1301
    %v1398 = vpack.c.b16 %v1310, %v1302
    %v1399 = vpack.c.b16 %v1311, %v1303
    %v1400 = vpack.c.b16 %v1320, %v1312
    %v1401 = vpack.c.b16 %v1321, %v1313
    %v1402 = vpack.c.b16 %v1322, %v1314
    %v1403 = vpack.c.b16 %v1323, %v1315
    %v1404 = vpack.c.b16 %v1324, %v1316
    %v1405 = vpack.c.b16 %v1325, %v1317
    %v1406 = vpack.c.b16 %v1326, %v1318
    %v1407 = vpack.c.b16 %v1327, %v1319
    %v1408 = vpack.c.b16 %v1336, %v1328
    %v1409 = vpack.c.b16 %v1337, %v1329
    %v1410 = vpack.c.b16 %v1338, %v1330
    %v1411 = vpack.c.b16 %v1339, %v1331
    %v1412 = vpack.c.b16 %v1340, %v1332
    %v1413 = vpack.c.b16 %v1341, %v1333
    %v1414 = vpack.c.b16 %v1342, %v1334
    %v1415 = vpack.c.b16 %v1343, %v1335
    %v1416 = vpack.c.b16 %v1352, %v1344
    %v1417 = vpack.c.b16 %v1353, %v1345
    %v1418 = vpack.c.b16 %v1354, %v1346
    %v1419 = vpack.c.b16 %v1355, %v1347
    %v1420 = vpack.c.b16 %v1356, %v1348
    %v1421 = vpack.c.b16 %v1357, %v1349
    %v1422 = vpack.c.b16 %v1358, %v1350
    %v1423 = vpack.c.b16 %v1359, %v1351
    %1488 = vmatprep.subr.bf16.mxu0 %v1417
    %1489 = vmatpush1.bf16.msra.mxu0 %v1416
    %1490 = vmatprep.subr.bf16.mxu0 %v1409
    %1491 = vmatpush1.bf16.msra.mxu0 %v1408
    %1492 = vmatprep.subr.bf16.mxu0 %v1401
    %1493 = vmatpush1.bf16.msra.mxu0 %v1400
    %1494 = vmatprep.subr.bf16.mxu0 %v1393
    %1495 = vmatpush1.bf16.msra.mxu0 %v1392
    %1496 = vmatprep.subr.bf16.mxu0 %v1385
    %1497 = vmatpush1.bf16.msra.mxu0 %v1384
    %1498 = vmatprep.subr.bf16.mxu0 %v1377
    %1499 = vmatpush1.bf16.msra.mxu0 %v1376
    %1500 = vmatprep.subr.bf16.mxu0 %v1369
    %1501 = vmatpush1.bf16.msra.mxu0 %v1368
    %1502 = vmatprep.subr.bf16.mxu0 %v1361
    %1503 = vmatpush1.bf16.msra.mxu0 %v1360
    %1504 = vmatprep.subr.bf16.mxu0 0
    %1505 = vmatpush2.bf16.msra.mxu0 0
    %1506 = vmatprep.subr.bf16.mxu0 0
    %1507 = vmatpush2.bf16.msra.mxu0 0
    %1508 = vmatprep.subr.bf16.mxu0 0
    %1509 = vmatpush2.bf16.msra.mxu0 0
    %1510 = vmatprep.subr.bf16.mxu0 0
    %1511 = vmatpush2.bf16.msra.mxu0 0
    %1512 = vmatprep.subr.bf16.mxu0 0
    %1513 = vmatpush2.bf16.msra.mxu0 0
    %1514 = vmatprep.subr.bf16.mxu0 0
    %1515 = vmatpush2.bf16.msra.mxu0 0
    %1516 = vmatprep.subr.bf16.mxu0 0
    %1517 = vmatpush2.bf16.msra.mxu0 0
    %1518 = vmatprep.subr.bf16.mxu0 0
    %1519 = vmatpush2.bf16.msra.mxu0 0
    %1520 = vmatprep.mubr.bf16.mxu0 0
    %1521 = vmatmul.mubr.bf16.gmra.mxu0 %v1061
    %v1522 = vpop.f32.mrf.mxu0
    %v1523 = vadd.f32 %v1131, %v1522
    %v1524 = vpop.f32.mrf.mxu0
    %v1525 = vadd.f32 %v1135, %v1524
    %v1526 = vpop.f32.mrf.mxu0
    %v1527 = vpop.f32.mrf.mxu0
    %1528 = vdwg.mxu0
    %1529 = vmatprep.subr.bf16.mxu0 %v1419
    %1530 = vmatpush1.bf16.msra.mxu0 %v1418
    %1531 = vmatprep.subr.bf16.mxu0 %v1411
    %1532 = vmatpush1.bf16.msra.mxu0 %v1410
    %1533 = vmatprep.subr.bf16.mxu0 %v1403
    %1534 = vmatpush1.bf16.msra.mxu0 %v1402
    %1535 = vmatprep.subr.bf16.mxu0 %v1395
    %1536 = vmatpush1.bf16.msra.mxu0 %v1394
    %1537 = vmatprep.subr.bf16.mxu0 %v1387
    %1538 = vmatpush1.bf16.msra.mxu0 %v1386
    %1539 = vmatprep.subr.bf16.mxu0 %v1379
    %1540 = vmatpush1.bf16.msra.mxu0 %v1378
    %1541 = vmatprep.subr.bf16.mxu0 %v1371
    %1542 = vmatpush1.bf16.msra.mxu0 %v1370
    %1543 = vmatprep.subr.bf16.mxu0 %v1363
    %1544 = vmatpush1.bf16.msra.mxu0 %v1362
    %1545 = vmatprep.subr.bf16.mxu0 0
    %1546 = vmatpush2.bf16.msra.mxu0 0
    %1547 = vmatprep.subr.bf16.mxu0 0
    %1548 = vmatpush2.bf16.msra.mxu0 0
    %1549 = vmatprep.subr.bf16.mxu0 0
    %1550 = vmatpush2.bf16.msra.mxu0 0
    %1551 = vmatprep.subr.bf16.mxu0 0
    %1552 = vmatpush2.bf16.msra.mxu0 0
    %1553 = vmatprep.subr.bf16.mxu0 0
    %1554 = vmatpush2.bf16.msra.mxu0 0
    %1555 = vmatprep.subr.bf16.mxu0 0
    %1556 = vmatpush2.bf16.msra.mxu0 0
    %1557 = vmatprep.subr.bf16.mxu0 0
    %1558 = vmatpush2.bf16.msra.mxu0 0
    %1559 = vmatprep.subr.bf16.mxu0 0
    %1560 = vmatpush2.bf16.msra.mxu0 0
    %1561 = vmatprep.mubr.bf16.mxu0 0
    %1562 = vmatmul.mubr.bf16.gmra.mxu0 %v1061
    %v1563 = vpop.f32.mrf.mxu0
    %v1564 = vadd.f32 %v1139, %v1563
    %v1565 = vpop.f32.mrf.mxu0
    %v1566 = vadd.f32 %v1143, %v1565
    %v1567 = vpop.f32.mrf.mxu0
    %v1568 = vpop.f32.mrf.mxu0
    %1569 = vdwg.mxu0
    %1570 = vmatprep.subr.bf16.mxu0 %v1421
    %1571 = vmatpush1.bf16.msra.mxu0 %v1420
    %1572 = vmatprep.subr.bf16.mxu0 %v1413
    %1573 = vmatpush1.bf16.msra.mxu0 %v1412
    %1574 = vmatprep.subr.bf16.mxu0 %v1405
    %1575 = vmatpush1.bf16.msra.mxu0 %v1404
    %1576 = vmatprep.subr.bf16.mxu0 %v1397
    %1577 = vmatpush1.bf16.msra.mxu0 %v1396
    %1578 = vmatprep.subr.bf16.mxu0 %v1389
    %1579 = vmatpush1.bf16.msra.mxu0 %v1388
    %1580 = vmatprep.subr.bf16.mxu0 %v1381
    %1581 = vmatpush1.bf16.msra.mxu0 %v1380
    %1582 = vmatprep.subr.bf16.mxu0 %v1373
    %1583 = vmatpush1.bf16.msra.mxu0 %v1372
    %1584 = vmatprep.subr.bf16.mxu0 %v1365
    %1585 = vmatpush1.bf16.msra.mxu0 %v1364
    %1586 = vmatprep.subr.bf16.mxu0 0
    %1587 = vmatpush2.bf16.msra.mxu0 0
    %1588 = vmatprep.subr.bf16.mxu0 0
    %1589 = vmatpush2.bf16.msra.mxu0 0
    %1590 = vmatprep.subr.bf16.mxu0 0
    %1591 = vmatpush2.bf16.msra.mxu0 0
    %1592 = vmatprep.subr.bf16.mxu0 0
    %1593 = vmatpush2.bf16.msra.mxu0 0
    %1594 = vmatprep.subr.bf16.mxu0 0
    %1595 = vmatpush2.bf16.msra.mxu0 0
    %1596 = vmatprep.subr.bf16.mxu0 0
    %1597 = vmatpush2.bf16.msra.mxu0 0
    %1598 = vmatprep.subr.bf16.mxu0 0
    %1599 = vmatpush2.bf16.msra.mxu0 0
    %1600 = vmatprep.subr.bf16.mxu0 0
    %1601 = vmatpush2.bf16.msra.mxu0 0
    %1602 = vmatprep.mubr.bf16.mxu0 0
    %1603 = vmatmul.mubr.bf16.gmra.mxu0 %v1061
    %v1604 = vpop.f32.mrf.mxu0
    %v1605 = vadd.f32 %v1147, %v1604
    %v1606 = vpop.f32.mrf.mxu0
    %v1607 = vadd.f32 %v1151, %v1606
    %v1608 = vpop.f32.mrf.mxu0
    %v1609 = vpop.f32.mrf.mxu0
    %1610 = vdwg.mxu0
    %1611 = vmatprep.subr.bf16.mxu0 %v1423
    %1612 = vmatpush1.bf16.msra.mxu0 %v1422
    %1613 = vmatprep.subr.bf16.mxu0 %v1415
    %1614 = vmatpush1.bf16.msra.mxu0 %v1414
    %1615 = vmatprep.subr.bf16.mxu0 %v1407
    %1616 = vmatpush1.bf16.msra.mxu0 %v1406
    %1617 = vmatprep.subr.bf16.mxu0 %v1399
    %1618 = vmatpush1.bf16.msra.mxu0 %v1398
    %1619 = vmatprep.subr.bf16.mxu0 %v1391
    %1620 = vmatpush1.bf16.msra.mxu0 %v1390
    %1621 = vmatprep.subr.bf16.mxu0 %v1383
    %1622 = vmatpush1.bf16.msra.mxu0 %v1382
    %1623 = vmatprep.subr.bf16.mxu0 %v1375
    %1624 = vmatpush1.bf16.msra.mxu0 %v1374
    %1625 = vmatprep.subr.bf16.mxu0 %v1367
    %1626 = vmatpush1.bf16.msra.mxu0 %v1366
    %1627 = vmatprep.subr.bf16.mxu0 0
    %1628 = vmatpush2.bf16.msra.mxu0 0
    %1629 = vmatprep.subr.bf16.mxu0 0
    %1630 = vmatpush2.bf16.msra.mxu0 0
    %1631 = vmatprep.subr.bf16.mxu0 0
    %1632 = vmatpush2.bf16.msra.mxu0 0
    %1633 = vmatprep.subr.bf16.mxu0 0
    %1634 = vmatpush2.bf16.msra.mxu0 0
    %1635 = vmatprep.subr.bf16.mxu0 0
    %1636 = vmatpush2.bf16.msra.mxu0 0
    %1637 = vmatprep.subr.bf16.mxu0 0
    %1638 = vmatpush2.bf16.msra.mxu0 0
    %1639 = vmatprep.subr.bf16.mxu0 0
    %1640 = vmatpush2.bf16.msra.mxu0 0
    %1641 = vmatprep.subr.bf16.mxu0 0
    %1642 = vmatpush2.bf16.msra.mxu0 0
    %1643 = vmatprep.mubr.bf16.mxu0 0
    %1644 = vmatmul.mubr.bf16.gmra.mxu0 %v1061
    %v1645 = vpop.f32.mrf.mxu0
    %v1646 = vadd.f32 %v1155, %v1645
    %v1647 = vpop.f32.mrf.mxu0
    %v1648 = vadd.f32 %v1159, %v1647
    %v1649 = vpop.f32.mrf.mxu0
    %v1650 = vpop.f32.mrf.mxu0
    %1651 = vdwg.mxu0
    %v1652 = vld [vmem:[#allocation7] sm:$0xff]
    %v1653 = vld [vmem:[#allocation7 + $0x8] sm:$0xff]
    %v1654 = vld [vmem:[#allocation7 + $0x10] sm:$0xff]
    %v1655 = vld [vmem:[#allocation7 + $0x18] sm:$0xff]
    %v1656 = vld [vmem:[#allocation7 + $0x20] sm:$0xff]
    %v1657 = vld [vmem:[#allocation7 + $0x28] sm:$0xff]
    %v1658 = vld [vmem:[#allocation7 + $0x30] sm:$0xff]
    %v1659 = vld [vmem:[#allocation7 + $0x38] sm:$0xff]
    %v1660 = vadd.f32 %v1523, %v1652
    %v1661 = vadd.f32 %v1525, %v1653
    %v1662 = vadd.f32 %v1564, %v1654
    %v1663 = vadd.f32 %v1566, %v1655
    %v1664 = vadd.f32 %v1605, %v1656
    %v1665 = vadd.f32 %v1607, %v1657
    %v1666 = vadd.f32 %v1646, %v1658
    %v1667 = vadd.f32 %v1648, %v1659
    %1668 = vst [vmem:[#allocation11] sm:$0xff] %v1660
    %1669 = vst [vmem:[#allocation11 + $0x8] sm:$0xff] %v1661
    %1670 = vst [vmem:[#allocation11 + $0x10] sm:$0xff] %v1662
    %1671 = vst [vmem:[#allocation11 + $0x18] sm:$0xff] %v1663
    %1672 = vst [vmem:[#allocation11 + $0x20] sm:$0xff] %v1664
    %1673 = vst [vmem:[#allocation11 + $0x28] sm:$0xff] %v1665
    %1674 = vst [vmem:[#allocation11 + $0x30] sm:$0xff] %v1666
    %1675 = vst [vmem:[#allocation11 + $0x38] sm:$0xff] %v1667
    %v1676 = vsub.f32 %v1660, %v94
    %v1677 = vsub.f32 %v1661, %v95
    %v1678 = vsub.f32 %v1662, %v96
    %v1679 = vsub.f32 %v1663, %v97
    %v1680 = vsub.f32 %v1664, %v98
    %v1681 = vsub.f32 %v1665, %v99
    %v1682 = vsub.f32 %v1666, %v100
    %v1683 = vsub.f32 %v1667, %v101
    %v1684 = vmul.f32 %v1676, %v1676
    %v1685 = vmul.f32 %v1677, %v1677
    %v1686 = vmul.f32 %v1678, %v1678
    %v1687 = vmul.f32 %v1679, %v1679
    %v1688 = vmul.f32 %v1680, %v1680
    %v1689 = vmul.f32 %v1681, %v1681
    %v1690 = vmul.f32 %v1682, %v1682
    %v1691 = vmul.f32 %v1683, %v1683
    %v1692 = vadd.f32 %v1684, %v1685
    %v1693 = vadd.f32 %v1692, %v1686
    %v1694 = vadd.f32 %v1693, %v1687
    %v1695 = vadd.f32 %v1694, %v1688
    %v1696 = vadd.f32 %v1695, %v1689
    %v1697 = vadd.f32 %v1696, %v1690
    %v1698 = vadd.f32 %v1697, %v1691
    %1699 = vadd.xlane.f32.xlu0 %v1698
    %v1700 = vpop.xlane.xlu0 %1699
    %v1701 = vsub.f32 0.0, %v1700
    %v1702 = vmul.f32 %v1059, %v1059
    %v1703 = vmul.f32 %v1057, %v1057
    %v1704 = vsub.f32 %v1702, %v1703
    %v1705 = vmul.f32 %v1704, 0.5
    %v1706 = vsub.f32 %v1705, %v1054
    %1707 = vadd.xlane.f32.xlu0 %v1706
    %v1708 = vpop.xlane.xlu0 %1707
    %v1709 = vlaneseq
    %v1710 = vand.u32 %v1709, 127
    %vm1711 = vcmp.eq.s32.totalorder %v1710, 0
    %vm1712 = vcmp.eq.s32.totalorder %v1710, 1
    %v1713 = vsel %vm1712, %v1708, 0.0
    %v1714 = vsel %vm1711, %v1701, %v1713
    %1715 = vst [vmem:[#allocation14] sm:$0xff] %v1714
    // Predicated region
    $region50: #{tpu_custom_call.1} parent=1 // pred_check
      _
    $region51: #{tpu_custom_call.1} parent=1 // pred_check_branch
      %1717 = sbr.rel (0) target = $region53
    $region52: #{tpu_custom_call.1} parent=1 // pred_region
      %s1719 = ssub.s32 1024, 1024
      %1720 = vsyncadd [#allocation4], %s1719
      %s1722 = sshll.u32 [#allocation11], 4
      %s1723 = int_to_ptr.vmem [resolvable:$true] %s1722
      %1725 = dma.vmem_to_hbm [thread:$0]  %s1723, 1024, %s7, [#allocation4]
    $region53: #{tpu_custom_call.1} parent=1 // pred_fallthru
      _
    // Predicated region
    $region54: #{tpu_custom_call.1} parent=1 // pred_check
      _
    $region55: #{tpu_custom_call.1} parent=1 // pred_check_branch
      %1727 = sbr.rel (0) target = $region57
    $region56: #{tpu_custom_call.1} parent=1 // pred_region
      %s1729 = ssub.s32 128, 128
      %1730 = vsyncadd [#allocation13], %s1729
      %s1732 = sshll.u32 [#allocation12], 4
      %s1733 = int_to_ptr.vmem [resolvable:$true] %s1732
      %1735 = dma.vmem_to_hbm [thread:$0]  %s1733, 128, %s8, [#allocation13]
    $region57: #{tpu_custom_call.1} parent=1 // pred_fallthru
      _
    // Predicated region
    $region58: #{tpu_custom_call.1} parent=1 // pred_check
      _
    $region59: #{tpu_custom_call.1} parent=1 // pred_check_branch
      %1737 = sbr.rel (0) target = $region61
    $region60: #{tpu_custom_call.1} parent=1 // pred_region
      %s1739 = ssub.s32 128, 128
      %1740 = vsyncadd [#allocation13], %s1739
      %s1742 = sshll.u32 [#allocation14], 4
      %s1743 = int_to_ptr.vmem [resolvable:$true] %s1742
      %1745 = dma.vmem_to_hbm [thread:$0]  %s1743, 128, %s9, [#allocation13]
    $region61: #{tpu_custom_call.1} parent=1 // pred_fallthru
      _
    // Predicated region
    $region62: #{tpu_custom_call.1} parent=1 // pred_check
      _
    $region63: #{tpu_custom_call.1} parent=1 // pred_check_branch
      %1747 = sbr.rel (0) target = $region65
    $region64: #{tpu_custom_call.1} parent=1 // pred_region
      %1748 = dma.done [#allocation4], 1024
    $region65: #{tpu_custom_call.1} parent=1 // pred_fallthru
      _
    // Predicated region
    $region66: #{tpu_custom_call.1} parent=1 // pred_check
      _
    $region67: #{tpu_custom_call.1} parent=1 // pred_check_branch
      %1750 = sbr.rel (0) target = $region69
    $region68: #{tpu_custom_call.1} parent=1 // pred_region
      %1751 = dma.done [#allocation13], 128
    $region69: #{tpu_custom_call.1} parent=1 // pred_fallthru
      _
    // Predicated region
    $region70: #{tpu_custom_call.1} parent=1 // pred_check
      _
    $region71: #{tpu_custom_call.1} parent=1 // pred_check_branch
      %1753 = sbr.rel (0) target = $region73
    $region72: #{tpu_custom_call.1} parent=1 // pred_region
      %1754 = dma.done [#allocation13], 128
    $region73: #{tpu_custom_call.1} parent=1 // pred_fallthru
      _
    %1755 = vsyncpa [#allocation3], 1
    %1756 = vsyncpa [#allocation6], 1
    %1757 = vsyncpa [#allocation9], 1
    %1758 = vsyncpa [#allocation4], 1
    %1759 = vsyncpa [#allocation13], 1

</llo_original>
